<compile_context>
chip_gen: v7x
topology: tpu7x:2x2x1
jax: 0.10.0
libtpu: 0.0.40
codegen_flags: <defaults>
</compile_context>

<pallas_src>
import functools
import math

import jax
import jax.numpy as jnp
from jax.experimental import pallas as pl
from jax.experimental.pallas import tpu as pltpu

# Explicit scoped-VMEM budget: big enough for full-K weight blocks at
# BERT-base sizes, still <= v7x's 64 MiB physical VMEM.
_VMEM_LIMIT = 48 * 1024 * 1024


# ----------------------------------------------------------------------------
# Tiling helper: largest tile <= pref that exactly divides `dim` and is a
# multiple of `align`; fall back to the full dim (full-dim blocks are always
# legal wrt the (8,128) rule).
# ----------------------------------------------------------------------------
def _pick_tile(dim, pref, align):
    if dim <= pref:
        return dim
    t = (pref // align) * align
    while t >= align:
        if dim % t == 0:
            return t
        t -= align
    return dim


# ----------------------------------------------------------------------------
# Fused matmul: Y = act(X @ W + b) [+ residual] [-> LayerNorm]
# Weight-resident: (K, N) weight is ONE block with a constant index_map, so it
# is fetched from HBM once per call.  Grid tiles only M.
# ----------------------------------------------------------------------------
def _fused_mm_kernel(x_ref, w_ref, b_ref, *rest, act, has_res, has_ln, eps):
    if has_res and has_ln:
        res_ref, g_ref, beta_ref, o_ref = rest
    elif has_res:
        res_ref, o_ref = rest
        g_ref = beta_ref = None
    elif has_ln:
        g_ref, beta_ref, o_ref = rest
        res_ref = None
    else:
        (o_ref,) = rest
        res_ref = g_ref = beta_ref = None

    y = jnp.dot(x_ref[...], w_ref[...], preferred_element_type=jnp.float32)
    y = y + b_ref[...].astype(jnp.float32)
    if act == "gelu":
        # tanh-approximate GELU (HF "gelu_new"); tanh runs on the EUP.
        c = math.sqrt(2.0 / math.pi)
        y = 0.5 * y * (1.0 + jnp.tanh(c * (y + 0.044715 * y * y * y)))
    elif act == "tanh":
        y = jnp.tanh(y)
    if has_res:
        y = y + res_ref[...].astype(jnp.float32)
    if has_ln:
        mu = jnp.mean(y, axis=-1, keepdims=True)
        yc = y - mu
        var = jnp.mean(yc * yc, axis=-1, keepdims=True)
        y = (yc * jax.lax.rsqrt(var + eps)) * g_ref[...].astype(jnp.float32) \
            + beta_ref[...].astype(jnp.float32)
    o_ref[...] = y.astype(o_ref.dtype)


def fused_linear(x, w, b, *, act="none", residual=None, ln=None, ln_eps=1e-12,
                 out_dtype=jnp.bfloat16, tm_pref=256):
    """x: (M, K) bf16, w: (K, N) bf16, b: (N,) f32.
    Optional: residual (M, N) added after act; ln=(gamma, beta) row LayerNorm
    (full N rows are always in one tile, so LN never needs a special case)."""
    M, K = x.shape
    _, N = w.shape
    tm = _pick_tile(M, tm_pref, 16)   # bf16 packs 16 rows per sublane register

    in_specs = [
        pl.BlockSpec((tm, K), lambda i: (i, 0)),
        pl.BlockSpec((K, N), lambda i: (0, 0)),    # constant -> fetched once
        pl.BlockSpec((1, N), lambda i: (0, 0)),
    ]
    inputs = [x, w, b.reshape(1, N).astype(jnp.float32)]
    if residual is not None:
        in_specs.append(pl.BlockSpec((tm, N), lambda i: (i, 0)))
        inputs.append(residual)
    if ln is not None:
        g, beta = ln
        in_specs += [pl.BlockSpec((1, N), lambda i: (0, 0)),
                     pl.BlockSpec((1, N), lambda i: (0, 0))]
        inputs += [g.reshape(1, N).astype(jnp.float32),
                   beta.reshape(1, N).astype(jnp.float32)]

    kernel = functools.partial(_fused_mm_kernel, act=act,
                               has_res=residual is not None,
                               has_ln=ln is not None, eps=ln_eps)
    return pl.pallas_call(
        kernel,
        out_shape=jax.ShapeDtypeStruct((M, N), out_dtype),
        grid=(M // tm,),
        in_specs=in_specs,
        out_specs=pl.BlockSpec((tm, N), lambda i: (i, 0)),
        compiler_params=pltpu.CompilerParams(
            dimension_semantics=("parallel",),
            vmem_limit_bytes=_VMEM_LIMIT),
    )(*inputs)


# ----------------------------------------------------------------------------
# Standalone LayerNorm (embeddings only; all other LNs are fused into matmuls)
# ----------------------------------------------------------------------------
def _layernorm_kernel(x_ref, g_ref, b_ref, o_ref, *, eps):
    x = x_ref[...].astype(jnp.float32)
    mu = jnp.mean(x, axis=-1, keepdims=True)
    xc = x - mu
    var = jnp.mean(xc * xc, axis=-1, keepdims=True)
    o_ref[...] = ((xc * jax.lax.rsqrt(var + eps)) * g_ref[...]
                  + b_ref[...]).astype(o_ref.dtype)


def layernorm(x, g, b, *, eps=1e-12, out_dtype=jnp.bfloat16, tm_pref=512):
    M, H = x.shape
    tm = _pick_tile(M, tm_pref, 16)
    return pl.pallas_call(
        functools.partial(_layernorm_kernel, eps=eps),
        out_shape=jax.ShapeDtypeStruct((M, H), out_dtype),
        grid=(M // tm,),
        in_specs=[pl.BlockSpec((tm, H), lambda i: (i, 0)),
                  pl.BlockSpec((1, H), lambda i: (0, 0)),
                  pl.BlockSpec((1, H), lambda i: (0, 0))],
        out_specs=pl.BlockSpec((tm, H), lambda i: (i, 0)),
        compiler_params=pltpu.CompilerParams(dimension_semantics=("parallel",)),
    )(x, g.reshape(1, H).astype(jnp.float32), b.reshape(1, H).astype(jnp.float32))


# ----------------------------------------------------------------------------
# Attention: one grid step per batch, all heads inside the kernel.
# qkv: (B, S, 3H) fused projection output (heads = contiguous d-lane column
# groups); prefix_k / prefix_v: (P, H) shared across batch (prefix mask is all
# ones -> additive 0, so only the (B, 1, S) self mask is passed).
# ----------------------------------------------------------------------------
def _attn_kernel(qkv_ref, pk_ref, pv_ref, mask_ref, o_ref, *,
                 num_heads, head_dim, scale):
    H = num_heads * head_dim
    m = mask_ref[0]                                        # (1, S) additive f32
    # TODO(synk): for best MXU/lane utilization at BERT-base sizes, emit QKV in
    # a head-major layout from the projection and process heads in 128-lane
    # pairs; 64-lane per-head slices under-use the 256-wide MXU on v6e/v7x.
    for h in range(num_heads):
        lo, hi = h * head_dim, (h + 1) * head_dim
        q = qkv_ref[0, :, lo:hi] * scale                   # scale folded into q
        ks = qkv_ref[0, :, H + lo:H + hi]                  # (S, d)
        vs = qkv_ref[0, :, 2 * H + lo:2 * H + hi]          # (S, d)
        pk = pk_ref[:, lo:hi]                              # (P, d)
        pv = pv_ref[:, lo:hi]                              # (P, d)
        # Split scores (no K/V concat); contract last dims -> no k transpose.
        s_p = jax.lax.dot_general(q, pk, (((1,), (1,)), ((), ())),
                                  preferred_element_type=jnp.float32)      # (S, P)
        s_s = jax.lax.dot_general(q, ks, (((1,), (1,)), ((), ())),
                                  preferred_element_type=jnp.float32) + m  # (S, S)
        row_max = jnp.maximum(jnp.max(s_p, axis=-1, keepdims=True),
                              jnp.max(s_s, axis=-1, keepdims=True))
        e_p = jnp.exp(s_p - row_max)
        e_s = jnp.exp(s_s - row_max)
        denom = (jnp.sum(e_p, axis=-1, keepdims=True)
                 + jnp.sum(e_s, axis=-1, keepdims=True))
        ctx = (jnp.dot(e_p.astype(pv.dtype), pv,
                       preferred_element_type=jnp.float32)
               + jnp.dot(e_s.astype(vs.dtype), vs,
                         preferred_element_type=jnp.float32)) / denom
        # Write this head's (S, d) context straight into the output slab.
        o_ref[0, :, lo:hi] = ctx.astype(o_ref.dtype)


def attention(qkv, prefix_k, prefix_v, self_mask, *, num_heads):
    B, S, three_h = qkv.shape
    H = three_h // 3
    d = H // num_heads
    P = prefix_k.shape[0]
    scale = 1.0 / math.sqrt(d)
    return pl.pallas_call(
        functools.partial(_attn_kernel, num_heads=num_heads, head_dim=d,
                          scale=scale),
        out_shape=jax.ShapeDtypeStruct((B, S, H), jnp.bfloat16),
        grid=(B,),
        in_specs=[
            pl.BlockSpec((1, S, three_h), lambda b: (b, 0, 0)),
            pl.BlockSpec((P, H), lambda b: (0, 0)),
            pl.BlockSpec((P, H), lambda b: (0, 0)),
            pl.BlockSpec((1, 1, S), lambda b: (b, 0, 0)),
        ],
        out_specs=pl.BlockSpec((1, S, H), lambda b: (b, 0, 0)),
        compiler_params=pltpu.CompilerParams(
            dimension_semantics=("parallel",),
            vmem_limit_bytes=_VMEM_LIMIT),
    )(qkv, prefix_k, prefix_v, self_mask)


# ----------------------------------------------------------------------------
# use_last_hidden_state head: masked mean & the exact-equality masked max pool.
# Tiled over batch so VMEM stays bounded at real (B, S, H) sizes.
# ----------------------------------------------------------------------------
def _pool_kernel(lhs_ref, mask_ref, mean_ref, max_ref):
    lhs = lhs_ref[0].astype(jnp.float32)                   # (S, H)
    m = mask_ref[0]                                        # (S, 1) f32
    masked = m * lhs
    denom = jnp.sum(m, axis=0, keepdims=True) + 1e-12      # (1, 1)
    mean_ref[0] = jnp.sum(masked, axis=0, keepdims=True) / denom
    # Exact replication of the torch masked-max trick (fused wheres, no temps):
    #   masked[masked == 0] = -inf ; masked[masked == 1] = 0 ; max(masked + lhs)
    m2 = jnp.where(masked == 0.0, -jnp.inf,
                   jnp.where(masked == 1.0, 0.0, masked))
    max_ref[0] = jnp.max(m2 + lhs, axis=0, keepdims=True)


def masked_pool(last_hidden_state, sent_mask):
    B, S, H = last_hidden_state.shape
    mask3 = sent_mask.astype(jnp.float32).reshape(B, S, 1)
    mean3, max3 = pl.pallas_call(
        _pool_kernel,
        out_shape=(jax.ShapeDtypeStruct((B, 1, H), jnp.float32),
                   jax.ShapeDtypeStruct((B, 1, H), jnp.float32)),
        grid=(B,),
        in_specs=[pl.BlockSpec((1, S, H), lambda b: (b, 0, 0)),
                  pl.BlockSpec((1, S, 1), lambda b: (b, 0, 0))],
        out_specs=(pl.BlockSpec((1, 1, H), lambda b: (b, 0, 0)),
                   pl.BlockSpec((1, 1, H), lambda b: (b, 0, 0))),
        compiler_params=pltpu.CompilerParams(dimension_semantics=("parallel",)),
    )(last_hidden_state, mask3)
    return mean3.reshape(B, H), max3.reshape(B, H)


# ----------------------------------------------------------------------------
# Parameter init (deterministic, synthetic).  Matrices in bf16, biases/LN f32.
# ----------------------------------------------------------------------------
def init_params(key, cfg):
    H = cfg["hidden_size"]
    I = cfg["intermediate_size"]
    L = cfg["num_hidden_layers"]
    keys = jax.random.split(key, 8 + L)

    def norm(k, shape):
        return (0.02 * jax.random.normal(k, shape, dtype=jnp.float32)
                ).astype(jnp.bfloat16)

    params = {
        "word_emb": norm(keys[0], (cfg["vocab_size"], H)),
        "pos_emb": norm(keys[1], (cfg["max_position_embeddings"], H)),
        "type_emb": norm(keys[2], (cfg["type_vocab_size"], H)),
        "emb_ln_g": jnp.ones((H,), jnp.float32),
        "emb_ln_b": jnp.zeros((H,), jnp.float32),
        "pooler_w": norm(keys[3], (H, H)),
        "pooler_b": jnp.zeros((H,), jnp.float32),
        # PrefixEncoder (prefix_projection=False): Embedding(pre_seq_len, L*2*H)
        "prefix_embedding": norm(keys[4], (cfg["pre_seq_len"], L * 2 * H)),
        # use_last_hidden_state=True -> Linear(3*H, num_labels)
        "cls_w": norm(keys[5], (3 * H, cfg["num_labels"])),
        "cls_b": jnp.zeros((cfg["num_labels"],), jnp.float32),
        "layers": [],
    }
    for l in range(L):
        lk = jax.random.split(keys[8 + l], 6)
        wq, wk, wv = norm(lk[0], (H, H)), norm(lk[1], (H, H)), norm(lk[2], (H, H))
        params["layers"].append({
            "wqkv": jnp.concatenate([wq, wk, wv], axis=1),     # (H, 3H)
            "bqkv": jnp.zeros((3 * H,), jnp.float32),
            "wo": norm(lk[3], (H, H)), "bo": jnp.zeros((H,), jnp.float32),
            "ln1_g": jnp.ones((H,), jnp.float32), "ln1_b": jnp.zeros((H,), jnp.float32),
            "wi": norm(lk[4], (H, I)), "bi": jnp.zeros((I,), jnp.float32),
            "wo2": norm(lk[5], (I, H)), "bo2": jnp.zeros((H,), jnp.float32),
            "ln2_g": jnp.ones((H,), jnp.float32), "ln2_b": jnp.zeros((H,), jnp.float32),
        })
    return params


# ----------------------------------------------------------------------------
# Forward pass (glue in plain JAX, hot paths in the Pallas kernels above).
# ----------------------------------------------------------------------------
def model_forward(params, cfg, input_ids, attention_mask, token_type_ids=None):
    B, S = input_ids.shape
    H = cfg["hidden_size"]
    nH = cfg["num_attention_heads"]
    L = cfg["num_hidden_layers"]
    P = cfg["pre_seq_len"]
    assert P + S <= cfg["max_position_embeddings"], "position ids out of range"

    # --- attention mask: prefix columns are all-ones -> additive 0, so only the
    # self part of the extended additive mask is needed.  (B, 1, S)
    self_mask = (1.0 - attention_mask.astype(jnp.float32))[:, None, :] * (-1e9)

    # --- embeddings (positions offset by past length, as in HF) ---------------
    # Gathers + add + cast fuse in XLA; only ONE bf16 (B*S, H) array touches HBM.
    # TODO(synk): embedding-table gathers stay in XLA; a Pallas DMA-gather adds
    # no value at these table sizes.
    if token_type_ids is None:
        token_type_ids = jnp.zeros((B, S), dtype=jnp.int32)
    position_ids = jnp.arange(P, P + S)
    emb = (jnp.take(params["word_emb"], input_ids, axis=0).astype(jnp.float32)
           + params["pos_emb"][position_ids][None, :, :].astype(jnp.float32)
           + jnp.take(params["type_emb"], token_type_ids, axis=0).astype(jnp.float32)
           ).astype(jnp.bfloat16)
    x2 = layernorm(emb.reshape(B * S, H),
                   params["emb_ln_g"], params["emb_ln_b"])          # (B*S,H) bf16

    # prefix past_key_values stay in flat (P, 2L*H) layout: layer l key at
    # columns [2lH,(2l+1)H), value at [(2l+1)H,(2l+2)H); heads are d-wide column
    # groups inside each H block (same values as the torch permute, no copies).
    pe = params["prefix_embedding"]
    # dropout on past_key_values is identity at inference.

    # Only the [CLS] rows are retained across layers (head needs the last 3).
    cls_hist = [x2.reshape(B, S, H)[:, 0, :]]
    for l in range(L):
        p = params["layers"][l]
        qkv = fused_linear(x2, p["wqkv"], p["bqkv"])                # (B*S, 3H)
        pk = pe[:, 2 * l * H:(2 * l + 1) * H]                       # (P, H)
        pv = pe[:, (2 * l + 1) * H:(2 * l + 2) * H]                 # (P, H)
        ctx = attention(qkv.reshape(B, S, 3 * H), pk, pv, self_mask,
                        num_heads=nH)                               # (B, S, H)
        x_attn = fused_linear(ctx.reshape(B * S, H), p["wo"], p["bo"],
                              residual=x2, ln=(p["ln1_g"], p["ln1_b"]))
        inter = fused_linear(x_attn, p["wi"], p["bi"], act="gelu")
        x2 = fused_linear(inter, p["wo2"], p["bo2"], residual=x_attn,
                          ln=(p["ln2_g"], p["ln2_b"]))
        cls_hist.append(x2.reshape(B, S, H)[:, 0, :])

    last_hidden_state = x2.reshape(B, S, H)

    # --- pooler (tanh dense on [CLS]) — tiny matmul, plain XLA f32 -------------
    pooled = jnp.tanh(cls_hist[-1].astype(jnp.float32)
                      @ params["pooler_w"].astype(jnp.float32)
                      + params["pooler_b"])                          # (B, H)

    # --- use_last_hidden_state=True head ---------------------------------------
    mean_p, max_p = masked_pool(last_hidden_state, attention_mask)
    pooler_output = (pooled
                     + cls_hist[-2].astype(jnp.float32)              # hidden_states[-2][:,0]
                     + cls_hist[-3].astype(jnp.float32))             # hidden_states[-3][:,0]
    cat_output = jnp.concatenate([pooler_output, mean_p, max_p], axis=-1)
    # dropout -> identity at inference; sigmoid defined but never applied.
    # Classifier is (B, 3H) x (3H, num_labels): tiny -> plain XLA f32 matmul.
    logits = cat_output @ params["cls_w"].astype(jnp.float32) + params["cls_b"]
    return logits


# ----------------------------------------------------------------------------
if __name__ == "__main__":
    cfg = dict(
        vocab_size=100,
        hidden_size=32,
        num_hidden_layers=2,
        num_attention_heads=2,
        intermediate_size=64,
        max_position_embeddings=64,
        type_vocab_size=2,
        pre_seq_len=4,
        num_labels=3,
        use_last_hidden_state=True,
        hidden_dropout_prob=0.1,   # identity at inference
    )

    key = jax.random.PRNGKey(0)
    pkey, ikey = jax.random.split(key)
    params = init_params(pkey, cfg)

    B, S = 2, 8
    input_ids = jax.random.randint(ikey, (B, S), 0, cfg["vocab_size"],
                                   dtype=jnp.int32)
    attention_mask = jnp.array([[1, 1, 1, 1, 1, 1, 0, 0],
                                [1, 1, 1, 1, 1, 1, 1, 1]], dtype=jnp.int32)

    @jax.jit
    def fwd(params, input_ids, attention_mask):
        return model_forward(params, cfg, input_ids, attention_mask)

    logits = fwd(params, input_ids, attention_mask)
    logits = jax.block_until_ready(logits)

    assert logits.shape == (B, cfg["num_labels"])
    assert bool(jnp.all(jnp.isfinite(logits)))
    print("KERNEL_OK")
</pallas_src>

<mosaic_0001>
module attributes {stable_mosaic.version = 11 : i64} {
  func.func @_fused_mm_kernel(%arg0: i32, %arg1: memref<16x32xbf16, #tpu.memory_space<vmem>>, %arg2: memref<32x96xbf16, #tpu.memory_space<vmem>>, %arg3: memref<1x96xf32, #tpu.memory_space<vmem>>, %arg4: memref<16x96xbf16, #tpu.memory_space<vmem>>) attributes {dimension_semantics = [#tpu.dimension_semantics<parallel>], iteration_bounds = array<i64: 1>, scalar_prefetch = 0 : i64, scratch_operands = 0 : i64, tpu.core_type = #tpu.core_type<tc>, window_params = [{transform_indices = @transform_0, window_bounds = array<i64: 16, 32>}, {pipeline_mode = #tpu.pipeline_mode<synchronous>, transform_indices = @transform_1, window_bounds = array<i64: 32, 96>}, {pipeline_mode = #tpu.pipeline_mode<synchronous>, transform_indices = @transform_2, window_bounds = array<i64: 1, 96>}, {transform_indices = @transform_3, window_bounds = array<i64: 16, 96>}]} {
    %c0 = arith.constant 0 : index
    %c0_0 = arith.constant 0 : index
    %0 = vector.load %arg1[%c0, %c0_0] : memref<16x32xbf16, #tpu.memory_space<vmem>>, vector<16x32xbf16>
    %c0_1 = arith.constant 0 : index
    %c0_2 = arith.constant 0 : index
    %1 = vector.load %arg2[%c0_1, %c0_2] : memref<32x96xbf16, #tpu.memory_space<vmem>>, vector<32x96xbf16>
    %cst = arith.constant dense<0.000000e+00> : vector<16x96xf32>
    %2 = tpu.matmul %0, %1, %cst {dimension_numbers = #tpu.dot_dimension_numbers<[1], [0], [0], [1], [0, 0, 1, 1], [], []>} : vector<16x32xbf16>, vector<32x96xbf16>, vector<16x96xf32> -> vector<16x96xf32>
    %c0_3 = arith.constant 0 : index
    %c0_4 = arith.constant 0 : index
    %3 = vector.load %arg3[%c0_3, %c0_4] : memref<1x96xf32, #tpu.memory_space<vmem>>, vector<1x96xf32>
    %4 = vector.broadcast %3 : vector<1x96xf32> to vector<16x96xf32>
    %5 = arith.addf %2, %4 : vector<16x96xf32>
    %6 = arith.truncf %5 : vector<16x96xf32> to vector<16x96xbf16>
    %c0_5 = arith.constant 0 : index
    %c0_6 = arith.constant 0 : index
    %7 = vector.load %arg4[%c0_5, %c0_6] : memref<16x96xbf16, #tpu.memory_space<vmem>>, vector<16x96xbf16>
    tpu.vector_store %arg4[%c0_5, %c0_6], %6 {strides = array<i32>} : memref<16x96xbf16, #tpu.memory_space<vmem>>, vector<16x96xbf16>,
    return
  }
  func.func @transform_0(%arg0: i32) -> (i32, i32) {
    %c0_i32 = arith.constant 0 : i32
    %c0_i32_0 = arith.constant 0 : i32
    return %arg0, %c0_i32 : i32, i32
  }
  func.func @transform_1(%arg0: i32) -> (i32, i32) {
    %c0_i32 = arith.constant 0 : i32
    %c0_i32_0 = arith.constant 0 : i32
    %c0_i32_1 = arith.constant 0 : i32
    return %c0_i32, %c0_i32_0 : i32, i32
  }
  func.func @transform_2(%arg0: i32) -> (i32, i32) {
    %c0_i32 = arith.constant 0 : i32
    %c0_i32_0 = arith.constant 0 : i32
    %c0_i32_1 = arith.constant 0 : i32
    return %c0_i32, %c0_i32_0 : i32, i32
  }
  func.func @transform_3(%arg0: i32) -> (i32, i32) {
    %c0_i32 = arith.constant 0 : i32
    %c0_i32_0 = arith.constant 0 : i32
    return %arg0, %c0_i32 : i32, i32
  }
}

module attributes {stable_mosaic.version = 11 : i64} {
  func.func @_fused_mm_kernel(%arg0: i32, %arg1: memref<16x32xbf16, #tpu.memory_space<vmem>>, %arg2: memref<32x32xbf16, #tpu.memory_space<vmem>>, %arg3: memref<1x32xf32, #tpu.memory_space<vmem>>, %arg4: memref<16x32xbf16, #tpu.memory_space<vmem>>, %arg5: memref<1x32xf32, #tpu.memory_space<vmem>>, %arg6: memref<1x32xf32, #tpu.memory_space<vmem>>, %arg7: memref<16x32xbf16, #tpu.memory_space<vmem>>) attributes {dimension_semantics = [#tpu.dimension_semantics<parallel>], iteration_bounds = array<i64: 1>, scalar_prefetch = 0 : i64, scratch_operands = 0 : i64, tpu.core_type = #tpu.core_type<tc>, window_params = [{transform_indices = @transform_0, window_bounds = array<i64: 16, 32>}, {pipeline_mode = #tpu.pipeline_mode<synchronous>, transform_indices = @transform_1, window_bounds = array<i64: 32, 32>}, {pipeline_mode = #tpu.pipeline_mode<synchronous>, transform_indices = @transform_2, window_bounds = array<i64: 1, 32>}, {transform_indices = @transform_3, window_bounds = array<i64: 16, 32>}, {pipeline_mode = #tpu.pipeline_mode<synchronous>, transform_indices = @transform_4, window_bounds = array<i64: 1, 32>}, {pipeline_mode = #tpu.pipeline_mode<synchronous>, transform_indices = @transform_5, window_bounds = array<i64: 1, 32>}, {transform_indices = @transform_6, window_bounds = array<i64: 16, 32>}]} {
    %c0 = arith.constant 0 : index
    %c0_0 = arith.constant 0 : index
    %0 = vector.load %arg1[%c0, %c0_0] : memref<16x32xbf16, #tpu.memory_space<vmem>>, vector<16x32xbf16>
    %c0_1 = arith.constant 0 : index
    %c0_2 = arith.constant 0 : index
    %1 = vector.load %arg2[%c0_1, %c0_2] : memref<32x32xbf16, #tpu.memory_space<vmem>>, vector<32x32xbf16>
    %cst = arith.constant dense<0.000000e+00> : vector<16x32xf32>
    %2 = tpu.matmul %0, %1, %cst {dimension_numbers = #tpu.dot_dimension_numbers<[1], [0], [0], [1], [0, 0, 1, 1], [], []>} : vector<16x32xbf16>, vector<32x32xbf16>, vector<16x32xf32> -> vector<16x32xf32>
    %c0_3 = arith.constant 0 : index
    %c0_4 = arith.constant 0 : index
    %3 = vector.load %arg3[%c0_3, %c0_4] : memref<1x32xf32, #tpu.memory_space<vmem>>, vector<1x32xf32>
    %4 = vector.broadcast %3 : vector<1x32xf32> to vector<16x32xf32>
    %5 = arith.addf %2, %4 : vector<16x32xf32>
    %c0_5 = arith.constant 0 : index
    %c0_6 = arith.constant 0 : index
    %6 = vector.load %arg4[%c0_5, %c0_6] : memref<16x32xbf16, #tpu.memory_space<vmem>>, vector<16x32xbf16>
    %7 = arith.extf %6 : vector<16x32xbf16> to vector<16x32xf32>
    %8 = arith.addf %5, %7 : vector<16x32xf32>
    %cst_7 = arith.constant dense<0.000000e+00> : vector<16xf32>
    %9 = vector.multi_reduction <add>, %8, %cst_7 [1] : vector<16x32xf32> to vector<16xf32>
    %10 = vector.shape_cast %9 : vector<16xf32> to vector<16x1xf32>
    %cst_8 = arith.constant 3.200000e+01 : f32
    %11 = vector.broadcast %cst_8 : f32 to vector<16x1xf32>
    %12 = arith.divf %10, %11 : vector<16x1xf32>
    %13 = vector.broadcast %12 : vector<16x1xf32> to vector<16x32xf32>
    %14 = arith.subf %8, %13 : vector<16x32xf32>
    %15 = arith.mulf %14, %14 : vector<16x32xf32>
    %cst_9 = arith.constant dense<0.000000e+00> : vector<16xf32>
    %16 = vector.multi_reduction <add>, %15, %cst_9 [1] : vector<16x32xf32> to vector<16xf32>
    %17 = vector.shape_cast %16 : vector<16xf32> to vector<16x1xf32>
    %cst_10 = arith.constant 3.200000e+01 : f32
    %18 = vector.broadcast %cst_10 : f32 to vector<16x1xf32>
    %19 = arith.divf %17, %18 : vector<16x1xf32>
    %cst_11 = arith.constant 9.99999996E-13 : f32
    %20 = vector.broadcast %cst_11 : f32 to vector<16x1xf32>
    %21 = arith.addf %19, %20 : vector<16x1xf32>
    %22 = math.rsqrt %21 : vector<16x1xf32>
    %23 = vector.broadcast %22 : vector<16x1xf32> to vector<16x32xf32>
    %24 = arith.mulf %14, %23 : vector<16x32xf32>
    %c0_12 = arith.constant 0 : index
    %c0_13 = arith.constant 0 : index
    %25 = vector.load %arg5[%c0_12, %c0_13] : memref<1x32xf32, #tpu.memory_space<vmem>>, vector<1x32xf32>
    %26 = vector.broadcast %25 : vector<1x32xf32> to vector<16x32xf32>
    %27 = arith.mulf %24, %26 : vector<16x32xf32>
    %c0_14 = arith.constant 0 : index
    %c0_15 = arith.constant 0 : index
    %28 = vector.load %arg6[%c0_14, %c0_15] : memref<1x32xf32, #tpu.memory_space<vmem>>, vector<1x32xf32>
    %29 = vector.broadcast %28 : vector<1x32xf32> to vector<16x32xf32>
    %30 = arith.addf %27, %29 : vector<16x32xf32>
    %31 = arith.truncf %30 : vector<16x32xf32> to vector<16x32xbf16>
    %c0_16 = arith.constant 0 : index
    %c0_17 = arith.constant 0 : index
    %32 = vector.load %arg7[%c0_16, %c0_17] : memref<16x32xbf16, #tpu.memory_space<vmem>>, vector<16x32xbf16>
    tpu.vector_store %arg7[%c0_16, %c0_17], %31 {strides = array<i32>} : memref<16x32xbf16, #tpu.memory_space<vmem>>, vector<16x32xbf16>,
    return
  }
  func.func @transform_0(%arg0: i32) -> (i32, i32) {
    %c0_i32 = arith.constant 0 : i32
    %c0_i32_0 = arith.constant 0 : i32
    return %arg0, %c0_i32 : i32, i32
  }
  func.func @transform_1(%arg0: i32) -> (i32, i32) {
    %c0_i32 = arith.constant 0 : i32
    %c0_i32_0 = arith.constant 0 : i32
    %c0_i32_1 = arith.constant 0 : i32
    return %c0_i32, %c0_i32_0 : i32, i32
  }
  func.func @transform_2(%arg0: i32) -> (i32, i32) {
    %c0_i32 = arith.constant 0 : i32
    %c0_i32_0 = arith.constant 0 : i32
    %c0_i32_1 = arith.constant 0 : i32
    return %c0_i32, %c0_i32_0 : i32, i32
  }
  func.func @transform_3(%arg0: i32) -> (i32, i32) {
    %c0_i32 = arith.constant 0 : i32
    %c0_i32_0 = arith.constant 0 : i32
    return %arg0, %c0_i32 : i32, i32
  }
  func.func @transform_4(%arg0: i32) -> (i32, i32) {
    %c0_i32 = arith.constant 0 : i32
    %c0_i32_0 = arith.constant 0 : i32
    %c0_i32_1 = arith.constant 0 : i32
    return %c0_i32, %c0_i32_0 : i32, i32
  }
  func.func @transform_5(%arg0: i32) -> (i32, i32) {
    %c0_i32 = arith.constant 0 : i32
    %c0_i32_0 = arith.constant 0 : i32
    %c0_i32_1 = arith.constant 0 : i32
    return %c0_i32, %c0_i32_0 : i32, i32
  }
  func.func @transform_6(%arg0: i32) -> (i32, i32) {
    %c0_i32 = arith.constant 0 : i32
    %c0_i32_0 = arith.constant 0 : i32
    return %arg0, %c0_i32 : i32, i32
  }
}

module attributes {stable_mosaic.version = 11 : i64} {
  func.func @_layernorm_kernel(%arg0: i32, %arg1: memref<16x32xbf16, #tpu.memory_space<vmem>>, %arg2: memref<1x32xf32, #tpu.memory_space<vmem>>, %arg3: memref<1x32xf32, #tpu.memory_space<vmem>>, %arg4: memref<16x32xbf16, #tpu.memory_space<vmem>>) attributes {dimension_semantics = [#tpu.dimension_semantics<parallel>], iteration_bounds = array<i64: 1>, scalar_prefetch = 0 : i64, scratch_operands = 0 : i64, tpu.core_type = #tpu.core_type<tc>, window_params = [{transform_indices = @transform_0, window_bounds = array<i64: 16, 32>}, {pipeline_mode = #tpu.pipeline_mode<synchronous>, transform_indices = @transform_1, window_bounds = array<i64: 1, 32>}, {pipeline_mode = #tpu.pipeline_mode<synchronous>, transform_indices = @transform_2, window_bounds = array<i64: 1, 32>}, {transform_indices = @transform_3, window_bounds = array<i64: 16, 32>}]} {
    %c0 = arith.constant 0 : index
    %c0_0 = arith.constant 0 : index
    %0 = vector.load %arg1[%c0, %c0_0] : memref<16x32xbf16, #tpu.memory_space<vmem>>, vector<16x32xbf16>
    %1 = arith.extf %0 : vector<16x32xbf16> to vector<16x32xf32>
    %cst = arith.constant dense<0.000000e+00> : vector<16xf32>
    %2 = vector.multi_reduction <add>, %1, %cst [1] : vector<16x32xf32> to vector<16xf32>
    %3 = vector.shape_cast %2 : vector<16xf32> to vector<16x1xf32>
    %cst_1 = arith.constant 3.200000e+01 : f32
    %4 = vector.broadcast %cst_1 : f32 to vector<16x1xf32>
    %5 = arith.divf %3, %4 : vector<16x1xf32>
    %6 = vector.broadcast %5 : vector<16x1xf32> to vector<16x32xf32>
    %7 = arith.subf %1, %6 : vector<16x32xf32>
    %8 = arith.mulf %7, %7 : vector<16x32xf32>
    %cst_2 = arith.constant dense<0.000000e+00> : vector<16xf32>
    %9 = vector.multi_reduction <add>, %8, %cst_2 [1] : vector<16x32xf32> to vector<16xf32>
    %10 = vector.shape_cast %9 : vector<16xf32> to vector<16x1xf32>
    %cst_3 = arith.constant 3.200000e+01 : f32
    %11 = vector.broadcast %cst_3 : f32 to vector<16x1xf32>
    %12 = arith.divf %10, %11 : vector<16x1xf32>
    %cst_4 = arith.constant 9.99999996E-13 : f32
    %13 = vector.broadcast %cst_4 : f32 to vector<16x1xf32>
    %14 = arith.addf %12, %13 : vector<16x1xf32>
    %15 = math.rsqrt %14 : vector<16x1xf32>
    %16 = vector.broadcast %15 : vector<16x1xf32> to vector<16x32xf32>
    %17 = arith.mulf %7, %16 : vector<16x32xf32>
    %c0_5 = arith.constant 0 : index
    %c0_6 = arith.constant 0 : index
    %18 = vector.load %arg2[%c0_5, %c0_6] : memref<1x32xf32, #tpu.memory_space<vmem>>, vector<1x32xf32>
    %19 = vector.broadcast %18 : vector<1x32xf32> to vector<16x32xf32>
    %20 = arith.mulf %17, %19 : vector<16x32xf32>
    %c0_7 = arith.constant 0 : index
    %c0_8 = arith.constant 0 : index
    %21 = vector.load %arg3[%c0_7, %c0_8] : memref<1x32xf32, #tpu.memory_space<vmem>>, vector<1x32xf32>
    %22 = vector.broadcast %21 : vector<1x32xf32> to vector<16x32xf32>
    %23 = arith.addf %20, %22 : vector<16x32xf32>
    %24 = arith.truncf %23 : vector<16x32xf32> to vector<16x32xbf16>
    %c0_9 = arith.constant 0 : index
    %c0_10 = arith.constant 0 : index
    %25 = vector.load %arg4[%c0_9, %c0_10] : memref<16x32xbf16, #tpu.memory_space<vmem>>, vector<16x32xbf16>
    tpu.vector_store %arg4[%c0_9, %c0_10], %24 {strides = array<i32>} : memref<16x32xbf16, #tpu.memory_space<vmem>>, vector<16x32xbf16>,
    return
  }
  func.func @transform_0(%arg0: i32) -> (i32, i32) {
    %c0_i32 = arith.constant 0 : i32
    %c0_i32_0 = arith.constant 0 : i32
    return %arg0, %c0_i32 : i32, i32
  }
  func.func @transform_1(%arg0: i32) -> (i32, i32) {
    %c0_i32 = arith.constant 0 : i32
    %c0_i32_0 = arith.constant 0 : i32
    %c0_i32_1 = arith.constant 0 : i32
    return %c0_i32, %c0_i32_0 : i32, i32
  }
  func.func @transform_2(%arg0: i32) -> (i32, i32) {
    %c0_i32 = arith.constant 0 : i32
    %c0_i32_0 = arith.constant 0 : i32
    %c0_i32_1 = arith.constant 0 : i32
    return %c0_i32, %c0_i32_0 : i32, i32
  }
  func.func @transform_3(%arg0: i32) -> (i32, i32) {
    %c0_i32 = arith.constant 0 : i32
    %c0_i32_0 = arith.constant 0 : i32
    return %arg0, %c0_i32 : i32, i32
  }
}

module attributes {stable_mosaic.version = 11 : i64} {
  func.func @_attn_kernel(%arg0: i32, %arg1: memref<1x8x96xbf16, #tpu.memory_space<vmem>>, %arg2: memref<4x32xbf16, #tpu.memory_space<vmem>>, %arg3: memref<4x32xbf16, #tpu.memory_space<vmem>>, %arg4: memref<1x1x8xf32, #tpu.memory_space<vmem>>, %arg5: memref<1x8x32xbf16, #tpu.memory_space<vmem>>) attributes {dimension_semantics = [#tpu.dimension_semantics<parallel>], iteration_bounds = array<i64: 2>, scalar_prefetch = 0 : i64, scratch_operands = 0 : i64, tpu.core_type = #tpu.core_type<tc>, window_params = [{transform_indices = @transform_0, window_bounds = array<i64: 1, 8, 96>}, {pipeline_mode = #tpu.pipeline_mode<synchronous>, transform_indices = @transform_1, window_bounds = array<i64: 4, 32>}, {pipeline_mode = #tpu.pipeline_mode<synchronous>, transform_indices = @transform_2, window_bounds = array<i64: 4, 32>}, {transform_indices = @transform_3, window_bounds = array<i64: 1, 1, 8>}, {transform_indices = @transform_4, window_bounds = array<i64: 1, 8, 32>}]} {
    %c0 = arith.constant 0 : index
    %c0_0 = arith.constant 0 : index
    %c0_1 = arith.constant 0 : index
    %0 = vector.load %arg4[%c0, %c0_0, %c0_1] : memref<1x1x8xf32, #tpu.memory_space<vmem>>, vector<1x1x8xf32>
    %1 = vector.shape_cast %0 : vector<1x1x8xf32> to vector<1x8xf32>
    %c0_2 = arith.constant 0 : index
    %c0_3 = arith.constant 0 : index
    %c0_4 = arith.constant 0 : index
    %2 = vector.load %arg1[%c0_2, %c0_3, %c0_4] : memref<1x8x96xbf16, #tpu.memory_space<vmem>>, vector<1x8x16xbf16>
    %3 = vector.shape_cast %2 : vector<1x8x16xbf16> to vector<8x16xbf16>
    %cst = arith.constant 2.500000e-01 : bf16
    %4 = vector.broadcast %cst : bf16 to vector<8x16xbf16>
    %5 = arith.mulf %3, %4 : vector<8x16xbf16>
    %c0_5 = arith.constant 0 : index
    %c0_6 = arith.constant 0 : index
    %c32 = arith.constant 32 : index
    %6 = vector.load %arg1[%c0_5, %c0_6, %c32] : memref<1x8x96xbf16, #tpu.memory_space<vmem>>, vector<1x8x16xbf16>
    %7 = vector.shape_cast %6 : vector<1x8x16xbf16> to vector<8x16xbf16>
    %c0_7 = arith.constant 0 : index
    %c0_8 = arith.constant 0 : index
    %c64 = arith.constant 64 : index
    %8 = vector.load %arg1[%c0_7, %c0_8, %c64] : memref<1x8x96xbf16, #tpu.memory_space<vmem>>, vector<1x8x16xbf16>
    %9 = vector.shape_cast %8 : vector<1x8x16xbf16> to vector<8x16xbf16>
    %c0_9 = arith.constant 0 : index
    %c0_10 = arith.constant 0 : index
    %10 = vector.load %arg2[%c0_9, %c0_10] : memref<4x32xbf16, #tpu.memory_space<vmem>>, vector<4x16xbf16>
    %c0_11 = arith.constant 0 : index
    %c0_12 = arith.constant 0 : index
    %11 = vector.load %arg3[%c0_11, %c0_12] : memref<4x32xbf16, #tpu.memory_space<vmem>>, vector<4x16xbf16>
    %cst_13 = arith.constant dense<0.000000e+00> : vector<8x4xf32>
    %12 = tpu.matmul %5, %10, %cst_13 {dimension_numbers = #tpu.dot_dimension_numbers<[1], [1], [0], [0], [0, 0, 1, 0], [], []>} : vector<8x16xbf16>, vector<4x16xbf16>, vector<8x4xf32> -> vector<8x4xf32>
    %cst_14 = arith.constant dense<0.000000e+00> : vector<8x8xf32>
    %13 = tpu.matmul %5, %7, %cst_14 {dimension_numbers = #tpu.dot_dimension_numbers<[1], [1], [0], [0], [0, 0, 1, 0], [], []>} : vector<8x16xbf16>, vector<8x16xbf16>, vector<8x8xf32> -> vector<8x8xf32>
    %14 = vector.broadcast %1 : vector<1x8xf32> to vector<8x8xf32>
    %15 = arith.addf %13, %14 : vector<8x8xf32>
    %cst_15 = arith.constant dense<0xFF800000> : vector<8xf32>
    %16 = vector.multi_reduction <maximumf>, %12, %cst_15 [1] : vector<8x4xf32> to vector<8xf32>
    %17 = vector.shape_cast %16 : vector<8xf32> to vector<8x1xf32>
    %cst_16 = arith.constant dense<0xFF800000> : vector<8xf32>
    %18 = vector.multi_reduction <maximumf>, %15, %cst_16 [1] : vector<8x8xf32> to vector<8xf32>
    %19 = vector.shape_cast %18 : vector<8xf32> to vector<8x1xf32>
    %20 = arith.maximumf %17, %19 : vector<8x1xf32>
    %21 = vector.broadcast %20 : vector<8x1xf32> to vector<8x4xf32>
    %22 = arith.subf %12, %21 : vector<8x4xf32>
    %23 = math.exp %22 : vector<8x4xf32>
    %24 = vector.broadcast %20 : vector<8x1xf32> to vector<8x8xf32>
    %25 = arith.subf %15, %24 : vector<8x8xf32>
    %26 = math.exp %25 : vector<8x8xf32>
    %cst_17 = arith.constant dense<0.000000e+00> : vector<8xf32>
    %27 = vector.multi_reduction <add>, %23, %cst_17 [1] : vector<8x4xf32> to vector<8xf32>
    %28 = vector.shape_cast %27 : vector<8xf32> to vector<8x1xf32>
    %cst_18 = arith.constant dense<0.000000e+00> : vector<8xf32>
    %29 = vector.multi_reduction <add>, %26, %cst_18 [1] : vector<8x8xf32> to vector<8xf32>
    %30 = vector.shape_cast %29 : vector<8xf32> to vector<8x1xf32>
    %31 = arith.addf %28, %30 : vector<8x1xf32>
    %32 = arith.truncf %23 : vector<8x4xf32> to vector<8x4xbf16>
    %cst_19 = arith.constant dense<0.000000e+00> : vector<8x16xf32>
    %33 = tpu.matmul %32, %11, %cst_19 {dimension_numbers = #tpu.dot_dimension_numbers<[1], [0], [0], [1], [0, 0, 1, 1], [], []>} : vector<8x4xbf16>, vector<4x16xbf16>, vector<8x16xf32> -> vector<8x16xf32>
    %34 = arith.truncf %26 : vector<8x8xf32> to vector<8x8xbf16>
    %cst_20 = arith.constant dense<0.000000e+00> : vector<8x16xf32>
    %35 = tpu.matmul %34, %9, %cst_20 {dimension_numbers = #tpu.dot_dimension_numbers<[1], [0], [0], [1], [0, 0, 1, 1], [], []>} : vector<8x8xbf16>, vector<8x16xbf16>, vector<8x16xf32> -> vector<8x16xf32>
    %36 = arith.addf %33, %35 : vector<8x16xf32>
    %37 = vector.broadcast %31 : vector<8x1xf32> to vector<8x16xf32>
    %38 = arith.divf %36, %37 : vector<8x16xf32>
    %39 = arith.truncf %38 : vector<8x16xf32> to vector<8x16xbf16>
    %c0_21 = arith.constant 0 : index
    %c0_22 = arith.constant 0 : index
    %c0_23 = arith.constant 0 : index
    %40 = vector.load %arg5[%c0_21, %c0_22, %c0_23] : memref<1x8x32xbf16, #tpu.memory_space<vmem>>, vector<1x8x16xbf16>
    %41 = vector.shape_cast %40 : vector<1x8x16xbf16> to vector<8x16xbf16>
    %42 = vector.shape_cast %39 : vector<8x16xbf16> to vector<1x8x16xbf16>
    tpu.vector_store %arg5[%c0_21, %c0_22, %c0_23], %42 {strides = array<i32>} : memref<1x8x32xbf16, #tpu.memory_space<vmem>>, vector<1x8x16xbf16>,
    %c0_24 = arith.constant 0 : index
    %c0_25 = arith.constant 0 : index
    %c16 = arith.constant 16 : index
    %43 = vector.load %arg1[%c0_24, %c0_25, %c16] : memref<1x8x96xbf16, #tpu.memory_space<vmem>>, vector<1x8x16xbf16>
    %44 = vector.shape_cast %43 : vector<1x8x16xbf16> to vector<8x16xbf16>
    %cst_26 = arith.constant 2.500000e-01 : bf16
    %45 = vector.broadcast %cst_26 : bf16 to vector<8x16xbf16>
    %46 = arith.mulf %44, %45 : vector<8x16xbf16>
    %c0_27 = arith.constant 0 : index
    %c0_28 = arith.constant 0 : index
    %c48 = arith.constant 48 : index
    %47 = vector.load %arg1[%c0_27, %c0_28, %c48] : memref<1x8x96xbf16, #tpu.memory_space<vmem>>, vector<1x8x16xbf16>
    %48 = vector.shape_cast %47 : vector<1x8x16xbf16> to vector<8x16xbf16>
    %c0_29 = arith.constant 0 : index
    %c0_30 = arith.constant 0 : index
    %c80 = arith.constant 80 : index
    %49 = vector.load %arg1[%c0_29, %c0_30, %c80] : memref<1x8x96xbf16, #tpu.memory_space<vmem>>, vector<1x8x16xbf16>
    %50 = vector.shape_cast %49 : vector<1x8x16xbf16> to vector<8x16xbf16>
    %c0_31 = arith.constant 0 : index
    %c16_32 = arith.constant 16 : index
    %51 = vector.load %arg2[%c0_31, %c16_32] : memref<4x32xbf16, #tpu.memory_space<vmem>>, vector<4x16xbf16>
    %c0_33 = arith.constant 0 : index
    %c16_34 = arith.constant 16 : index
    %52 = vector.load %arg3[%c0_33, %c16_34] : memref<4x32xbf16, #tpu.memory_space<vmem>>, vector<4x16xbf16>
    %cst_35 = arith.constant dense<0.000000e+00> : vector<8x4xf32>
    %53 = tpu.matmul %46, %51, %cst_35 {dimension_numbers = #tpu.dot_dimension_numbers<[1], [1], [0], [0], [0, 0, 1, 0], [], []>} : vector<8x16xbf16>, vector<4x16xbf16>, vector<8x4xf32> -> vector<8x4xf32>
    %cst_36 = arith.constant dense<0.000000e+00> : vector<8x8xf32>
    %54 = tpu.matmul %46, %48, %cst_36 {dimension_numbers = #tpu.dot_dimension_numbers<[1], [1], [0], [0], [0, 0, 1, 0], [], []>} : vector<8x16xbf16>, vector<8x16xbf16>, vector<8x8xf32> -> vector<8x8xf32>
    %55 = vector.broadcast %1 : vector<1x8xf32> to vector<8x8xf32>
    %56 = arith.addf %54, %55 : vector<8x8xf32>
    %cst_37 = arith.constant dense<0xFF800000> : vector<8xf32>
    %57 = vector.multi_reduction <maximumf>, %53, %cst_37 [1] : vector<8x4xf32> to vector<8xf32>
    %58 = vector.shape_cast %57 : vector<8xf32> to vector<8x1xf32>
    %cst_38 = arith.constant dense<0xFF800000> : vector<8xf32>
    %59 = vector.multi_reduction <maximumf>, %56, %cst_38 [1] : vector<8x8xf32> to vector<8xf32>
    %60 = vector.shape_cast %59 : vector<8xf32> to vector<8x1xf32>
    %61 = arith.maximumf %58, %60 : vector<8x1xf32>
    %62 = vector.broadcast %61 : vector<8x1xf32> to vector<8x4xf32>
    %63 = arith.subf %53, %62 : vector<8x4xf32>
    %64 = math.exp %63 : vector<8x4xf32>
    %65 = vector.broadcast %61 : vector<8x1xf32> to vector<8x8xf32>
    %66 = arith.subf %56, %65 : vector<8x8xf32>
    %67 = math.exp %66 : vector<8x8xf32>
    %cst_39 = arith.constant dense<0.000000e+00> : vector<8xf32>
    %68 = vector.multi_reduction <add>, %64, %cst_39 [1] : vector<8x4xf32> to vector<8xf32>
    %69 = vector.shape_cast %68 : vector<8xf32> to vector<8x1xf32>
    %cst_40 = arith.constant dense<0.000000e+00> : vector<8xf32>
    %70 = vector.multi_reduction <add>, %67, %cst_40 [1] : vector<8x8xf32> to vector<8xf32>
    %71 = vector.shape_cast %70 : vector<8xf32> to vector<8x1xf32>
    %72 = arith.addf %69, %71 : vector<8x1xf32>
    %73 = arith.truncf %64 : vector<8x4xf32> to vector<8x4xbf16>
    %cst_41 = arith.constant dense<0.000000e+00> : vector<8x16xf32>
    %74 = tpu.matmul %73, %52, %cst_41 {dimension_numbers = #tpu.dot_dimension_numbers<[1], [0], [0], [1], [0, 0, 1, 1], [], []>} : vector<8x4xbf16>, vector<4x16xbf16>, vector<8x16xf32> -> vector<8x16xf32>
    %75 = arith.truncf %67 : vector<8x8xf32> to vector<8x8xbf16>
    %cst_42 = arith.constant dense<0.000000e+00> : vector<8x16xf32>
    %76 = tpu.matmul %75, %50, %cst_42 {dimension_numbers = #tpu.dot_dimension_numbers<[1], [0], [0], [1], [0, 0, 1, 1], [], []>} : vector<8x8xbf16>, vector<8x16xbf16>, vector<8x16xf32> -> vector<8x16xf32>
    %77 = arith.addf %74, %76 : vector<8x16xf32>
    %78 = vector.broadcast %72 : vector<8x1xf32> to vector<8x16xf32>
    %79 = arith.divf %77, %78 : vector<8x16xf32>
    %80 = arith.truncf %79 : vector<8x16xf32> to vector<8x16xbf16>
    %c0_43 = arith.constant 0 : index
    %c0_44 = arith.constant 0 : index
    %c16_45 = arith.constant 16 : index
    %81 = vector.load %arg5[%c0_43, %c0_44, %c16_45] : memref<1x8x32xbf16, #tpu.memory_space<vmem>>, vector<1x8x16xbf16>
    %82 = vector.shape_cast %81 : vector<1x8x16xbf16> to vector<8x16xbf16>
    %83 = vector.shape_cast %80 : vector<8x16xbf16> to vector<1x8x16xbf16>
    tpu.vector_store %arg5[%c0_43, %c0_44, %c16_45], %83 {strides = array<i32>} : memref<1x8x32xbf16, #tpu.memory_space<vmem>>, vector<1x8x16xbf16>,
    return
  }
  func.func @transform_0(%arg0: i32) -> (i32, i32, i32) {
    %c0_i32 = arith.constant 0 : i32
    %c0_i32_0 = arith.constant 0 : i32
    %c0_i32_1 = arith.constant 0 : i32
    return %arg0, %c0_i32, %c0_i32_0 : i32, i32, i32
  }
  func.func @transform_1(%arg0: i32) -> (i32, i32) {
    %c0_i32 = arith.constant 0 : i32
    %c0_i32_0 = arith.constant 0 : i32
    %c0_i32_1 = arith.constant 0 : i32
    return %c0_i32, %c0_i32_0 : i32, i32
  }
  func.func @transform_2(%arg0: i32) -> (i32, i32) {
    %c0_i32 = arith.constant 0 : i32
    %c0_i32_0 = arith.constant 0 : i32
    %c0_i32_1 = arith.constant 0 : i32
    return %c0_i32, %c0_i32_0 : i32, i32
  }
  func.func @transform_3(%arg0: i32) -> (i32, i32, i32) {
    %c0_i32 = arith.constant 0 : i32
    %c0_i32_0 = arith.constant 0 : i32
    %c0_i32_1 = arith.constant 0 : i32
    return %arg0, %c0_i32, %c0_i32_0 : i32, i32, i32
  }
  func.func @transform_4(%arg0: i32) -> (i32, i32, i32) {
    %c0_i32 = arith.constant 0 : i32
    %c0_i32_0 = arith.constant 0 : i32
    %c0_i32_1 = arith.constant 0 : i32
    return %arg0, %c0_i32, %c0_i32_0 : i32, i32, i32
  }
}

module attributes {stable_mosaic.version = 11 : i64} {
  func.func @_fused_mm_kernel(%arg0: i32, %arg1: memref<16x32xbf16, #tpu.memory_space<vmem>>, %arg2: memref<32x64xbf16, #tpu.memory_space<vmem>>, %arg3: memref<1x64xf32, #tpu.memory_space<vmem>>, %arg4: memref<16x64xbf16, #tpu.memory_space<vmem>>) attributes {dimension_semantics = [#tpu.dimension_semantics<parallel>], iteration_bounds = array<i64: 1>, scalar_prefetch = 0 : i64, scratch_operands = 0 : i64, tpu.core_type = #tpu.core_type<tc>, window_params = [{transform_indices = @transform_0, window_bounds = array<i64: 16, 32>}, {pipeline_mode = #tpu.pipeline_mode<synchronous>, transform_indices = @transform_1, window_bounds = array<i64: 32, 64>}, {pipeline_mode = #tpu.pipeline_mode<synchronous>, transform_indices = @transform_2, window_bounds = array<i64: 1, 64>}, {transform_indices = @transform_3, window_bounds = array<i64: 16, 64>}]} {
    %c0 = arith.constant 0 : index
    %c0_0 = arith.constant 0 : index
    %0 = vector.load %arg1[%c0, %c0_0] : memref<16x32xbf16, #tpu.memory_space<vmem>>, vector<16x32xbf16>
    %c0_1 = arith.constant 0 : index
    %c0_2 = arith.constant 0 : index
    %1 = vector.load %arg2[%c0_1, %c0_2] : memref<32x64xbf16, #tpu.memory_space<vmem>>, vector<32x64xbf16>
    %cst = arith.constant dense<0.000000e+00> : vector<16x64xf32>
    %2 = tpu.matmul %0, %1, %cst {dimension_numbers = #tpu.dot_dimension_numbers<[1], [0], [0], [1], [0, 0, 1, 1], [], []>} : vector<16x32xbf16>, vector<32x64xbf16>, vector<16x64xf32> -> vector<16x64xf32>
    %c0_3 = arith.constant 0 : index
    %c0_4 = arith.constant 0 : index
    %3 = vector.load %arg3[%c0_3, %c0_4] : memref<1x64xf32, #tpu.memory_space<vmem>>, vector<1x64xf32>
    %4 = vector.broadcast %3 : vector<1x64xf32> to vector<16x64xf32>
    %5 = arith.addf %2, %4 : vector<16x64xf32>
    %cst_5 = arith.constant 5.000000e-01 : f32
    %6 = vector.broadcast %cst_5 : f32 to vector<16x64xf32>
    %7 = arith.mulf %6, %5 : vector<16x64xf32>
    %cst_6 = arith.constant 4.471500e-02 : f32
    %8 = vector.broadcast %cst_6 : f32 to vector<16x64xf32>
    %9 = arith.mulf %8, %5 : vector<16x64xf32>
    %10 = arith.mulf %9, %5 : vector<16x64xf32>
    %11 = arith.mulf %10, %5 : vector<16x64xf32>
    %12 = arith.addf %5, %11 : vector<16x64xf32>
    %cst_7 = arith.constant 0.797884583 : f32
    %13 = vector.broadcast %cst_7 : f32 to vector<16x64xf32>
    %14 = arith.mulf %13, %12 : vector<16x64xf32>
    %15 = math.tanh %14 : vector<16x64xf32>
    %cst_8 = arith.constant 1.000000e+00 : f32
    %16 = vector.broadcast %cst_8 : f32 to vector<16x64xf32>
    %17 = arith.addf %16, %15 : vector<16x64xf32>
    %18 = arith.mulf %7, %17 : vector<16x64xf32>
    %19 = arith.truncf %18 : vector<16x64xf32> to vector<16x64xbf16>
    %c0_9 = arith.constant 0 : index
    %c0_10 = arith.constant 0 : index
    %20 = vector.load %arg4[%c0_9, %c0_10] : memref<16x64xbf16, #tpu.memory_space<vmem>>, vector<16x64xbf16>
    tpu.vector_store %arg4[%c0_9, %c0_10], %19 {strides = array<i32>} : memref<16x64xbf16, #tpu.memory_space<vmem>>, vector<16x64xbf16>,
    return
  }
  func.func @transform_0(%arg0: i32) -> (i32, i32) {
    %c0_i32 = arith.constant 0 : i32
    %c0_i32_0 = arith.constant 0 : i32
    return %arg0, %c0_i32 : i32, i32
  }
  func.func @transform_1(%arg0: i32) -> (i32, i32) {
    %c0_i32 = arith.constant 0 : i32
    %c0_i32_0 = arith.constant 0 : i32
    %c0_i32_1 = arith.constant 0 : i32
    return %c0_i32, %c0_i32_0 : i32, i32
  }
  func.func @transform_2(%arg0: i32) -> (i32, i32) {
    %c0_i32 = arith.constant 0 : i32
    %c0_i32_0 = arith.constant 0 : i32
    %c0_i32_1 = arith.constant 0 : i32
    return %c0_i32, %c0_i32_0 : i32, i32
  }
  func.func @transform_3(%arg0: i32) -> (i32, i32) {
    %c0_i32 = arith.constant 0 : i32
    %c0_i32_0 = arith.constant 0 : i32
    return %arg0, %c0_i32 : i32, i32
  }
}

module attributes {stable_mosaic.version = 11 : i64} {
  func.func @_fused_mm_kernel(%arg0: i32, %arg1: memref<16x64xbf16, #tpu.memory_space<vmem>>, %arg2: memref<64x32xbf16, #tpu.memory_space<vmem>>, %arg3: memref<1x32xf32, #tpu.memory_space<vmem>>, %arg4: memref<16x32xbf16, #tpu.memory_space<vmem>>, %arg5: memref<1x32xf32, #tpu.memory_space<vmem>>, %arg6: memref<1x32xf32, #tpu.memory_space<vmem>>, %arg7: memref<16x32xbf16, #tpu.memory_space<vmem>>) attributes {dimension_semantics = [#tpu.dimension_semantics<parallel>], iteration_bounds = array<i64: 1>, scalar_prefetch = 0 : i64, scratch_operands = 0 : i64, tpu.core_type = #tpu.core_type<tc>, window_params = [{transform_indices = @transform_0, window_bounds = array<i64: 16, 64>}, {pipeline_mode = #tpu.pipeline_mode<synchronous>, transform_indices = @transform_1, window_bounds = array<i64: 64, 32>}, {pipeline_mode = #tpu.pipeline_mode<synchronous>, transform_indices = @transform_2, window_bounds = array<i64: 1, 32>}, {transform_indices = @transform_3, window_bounds = array<i64: 16, 32>}, {pipeline_mode = #tpu.pipeline_mode<synchronous>, transform_indices = @transform_4, window_bounds = array<i64: 1, 32>}, {pipeline_mode = #tpu.pipeline_mode<synchronous>, transform_indices = @transform_5, window_bounds = array<i64: 1, 32>}, {transform_indices = @transform_6, window_bounds = array<i64: 16, 32>}]} {
    %c0 = arith.constant 0 : index
    %c0_0 = arith.constant 0 : index
    %0 = vector.load %arg1[%c0, %c0_0] : memref<16x64xbf16, #tpu.memory_space<vmem>>, vector<16x64xbf16>
    %c0_1 = arith.constant 0 : index
    %c0_2 = arith.constant 0 : index
    %1 = vector.load %arg2[%c0_1, %c0_2] : memref<64x32xbf16, #tpu.memory_space<vmem>>, vector<64x32xbf16>
    %cst = arith.constant dense<0.000000e+00> : vector<16x32xf32>
    %2 = tpu.matmul %0, %1, %cst {dimension_numbers = #tpu.dot_dimension_numbers<[1], [0], [0], [1], [0, 0, 1, 1], [], []>} : vector<16x64xbf16>, vector<64x32xbf16>, vector<16x32xf32> -> vector<16x32xf32>
    %c0_3 = arith.constant 0 : index
    %c0_4 = arith.constant 0 : index
    %3 = vector.load %arg3[%c0_3, %c0_4] : memref<1x32xf32, #tpu.memory_space<vmem>>, vector<1x32xf32>
    %4 = vector.broadcast %3 : vector<1x32xf32> to vector<16x32xf32>
    %5 = arith.addf %2, %4 : vector<16x32xf32>
    %c0_5 = arith.constant 0 : index
    %c0_6 = arith.constant 0 : index
    %6 = vector.load %arg4[%c0_5, %c0_6] : memref<16x32xbf16, #tpu.memory_space<vmem>>, vector<16x32xbf16>
    %7 = arith.extf %6 : vector<16x32xbf16> to vector<16x32xf32>
    %8 = arith.addf %5, %7 : vector<16x32xf32>
    %cst_7 = arith.constant dense<0.000000e+00> : vector<16xf32>
    %9 = vector.multi_reduction <add>, %8, %cst_7 [1] : vector<16x32xf32> to vector<16xf32>
    %10 = vector.shape_cast %9 : vector<16xf32> to vector<16x1xf32>
    %cst_8 = arith.constant 3.200000e+01 : f32
    %11 = vector.broadcast %cst_8 : f32 to vector<16x1xf32>
    %12 = arith.divf %10, %11 : vector<16x1xf32>
    %13 = vector.broadcast %12 : vector<16x1xf32> to vector<16x32xf32>
    %14 = arith.subf %8, %13 : vector<16x32xf32>
    %15 = arith.mulf %14, %14 : vector<16x32xf32>
    %cst_9 = arith.constant dense<0.000000e+00> : vector<16xf32>
    %16 = vector.multi_reduction <add>, %15, %cst_9 [1] : vector<16x32xf32> to vector<16xf32>
    %17 = vector.shape_cast %16 : vector<16xf32> to vector<16x1xf32>
    %cst_10 = arith.constant 3.200000e+01 : f32
    %18 = vector.broadcast %cst_10 : f32 to vector<16x1xf32>
    %19 = arith.divf %17, %18 : vector<16x1xf32>
    %cst_11 = arith.constant 9.99999996E-13 : f32
    %20 = vector.broadcast %cst_11 : f32 to vector<16x1xf32>
    %21 = arith.addf %19, %20 : vector<16x1xf32>
    %22 = math.rsqrt %21 : vector<16x1xf32>
    %23 = vector.broadcast %22 : vector<16x1xf32> to vector<16x32xf32>
    %24 = arith.mulf %14, %23 : vector<16x32xf32>
    %c0_12 = arith.constant 0 : index
    %c0_13 = arith.constant 0 : index
    %25 = vector.load %arg5[%c0_12, %c0_13] : memref<1x32xf32, #tpu.memory_space<vmem>>, vector<1x32xf32>
    %26 = vector.broadcast %25 : vector<1x32xf32> to vector<16x32xf32>
    %27 = arith.mulf %24, %26 : vector<16x32xf32>
    %c0_14 = arith.constant 0 : index
    %c0_15 = arith.constant 0 : index
    %28 = vector.load %arg6[%c0_14, %c0_15] : memref<1x32xf32, #tpu.memory_space<vmem>>, vector<1x32xf32>
    %29 = vector.broadcast %28 : vector<1x32xf32> to vector<16x32xf32>
    %30 = arith.addf %27, %29 : vector<16x32xf32>
    %31 = arith.truncf %30 : vector<16x32xf32> to vector<16x32xbf16>
    %c0_16 = arith.constant 0 : index
    %c0_17 = arith.constant 0 : index
    %32 = vector.load %arg7[%c0_16, %c0_17] : memref<16x32xbf16, #tpu.memory_space<vmem>>, vector<16x32xbf16>
    tpu.vector_store %arg7[%c0_16, %c0_17], %31 {strides = array<i32>} : memref<16x32xbf16, #tpu.memory_space<vmem>>, vector<16x32xbf16>,
    return
  }
  func.func @transform_0(%arg0: i32) -> (i32, i32) {
    %c0_i32 = arith.constant 0 : i32
    %c0_i32_0 = arith.constant 0 : i32
    return %arg0, %c0_i32 : i32, i32
  }
  func.func @transform_1(%arg0: i32) -> (i32, i32) {
    %c0_i32 = arith.constant 0 : i32
    %c0_i32_0 = arith.constant 0 : i32
    %c0_i32_1 = arith.constant 0 : i32
    return %c0_i32, %c0_i32_0 : i32, i32
  }
  func.func @transform_2(%arg0: i32) -> (i32, i32) {
    %c0_i32 = arith.constant 0 : i32
    %c0_i32_0 = arith.constant 0 : i32
    %c0_i32_1 = arith.constant 0 : i32
    return %c0_i32, %c0_i32_0 : i32, i32
  }
  func.func @transform_3(%arg0: i32) -> (i32, i32) {
    %c0_i32 = arith.constant 0 : i32
    %c0_i32_0 = arith.constant 0 : i32
    return %arg0, %c0_i32 : i32, i32
  }
  func.func @transform_4(%arg0: i32) -> (i32, i32) {
    %c0_i32 = arith.constant 0 : i32
    %c0_i32_0 = arith.constant 0 : i32
    %c0_i32_1 = arith.constant 0 : i32
    return %c0_i32, %c0_i32_0 : i32, i32
  }
  func.func @transform_5(%arg0: i32) -> (i32, i32) {
    %c0_i32 = arith.constant 0 : i32
    %c0_i32_0 = arith.constant 0 : i32
    %c0_i32_1 = arith.constant 0 : i32
    return %c0_i32, %c0_i32_0 : i32, i32
  }
  func.func @transform_6(%arg0: i32) -> (i32, i32) {
    %c0_i32 = arith.constant 0 : i32
    %c0_i32_0 = arith.constant 0 : i32
    return %arg0, %c0_i32 : i32, i32
  }
}

module attributes {stable_mosaic.version = 11 : i64} {
  func.func @_pool_kernel(%arg0: i32, %arg1: memref<1x8x32xbf16, #tpu.memory_space<vmem>>, %arg2: memref<1x8x1xf32, #tpu.memory_space<vmem>>, %arg3: memref<1x1x32xf32, #tpu.memory_space<vmem>>, %arg4: memref<1x1x32xf32, #tpu.memory_space<vmem>>) attributes {dimension_semantics = [#tpu.dimension_semantics<parallel>], iteration_bounds = array<i64: 2>, scalar_prefetch = 0 : i64, scratch_operands = 0 : i64, tpu.core_type = #tpu.core_type<tc>, window_params = [{transform_indices = @transform_0, window_bounds = array<i64: 1, 8, 32>}, {transform_indices = @transform_1, window_bounds = array<i64: 1, 8, 1>}, {transform_indices = @transform_2, window_bounds = array<i64: 1, 1, 32>}, {transform_indices = @transform_3, window_bounds = array<i64: 1, 1, 32>}]} {
    %c0 = arith.constant 0 : index
    %c0_0 = arith.constant 0 : index
    %c0_1 = arith.constant 0 : index
    %0 = vector.load %arg1[%c0, %c0_0, %c0_1] : memref<1x8x32xbf16, #tpu.memory_space<vmem>>, vector<1x8x32xbf16>
    %1 = vector.shape_cast %0 : vector<1x8x32xbf16> to vector<8x32xbf16>
    %2 = arith.extf %1 : vector<8x32xbf16> to vector<8x32xf32>
    %c0_2 = arith.constant 0 : index
    %c0_3 = arith.constant 0 : index
    %c0_4 = arith.constant 0 : index
    %3 = vector.load %arg2[%c0_2, %c0_3, %c0_4] : memref<1x8x1xf32, #tpu.memory_space<vmem>>, vector<1x8x1xf32>
    %4 = vector.shape_cast %3 : vector<1x8x1xf32> to vector<8x1xf32>
    %5 = vector.broadcast %4 : vector<8x1xf32> to vector<8x32xf32>
    %6 = arith.mulf %5, %2 : vector<8x32xf32>
    %cst = arith.constant dense<0.000000e+00> : vector<1xf32>
    %7 = vector.multi_reduction <add>, %4, %cst [0] : vector<8x1xf32> to vector<1xf32>
    %8 = vector.shape_cast %7 : vector<1xf32> to vector<1x1xf32>
    %cst_5 = arith.constant 9.99999996E-13 : f32
    %9 = vector.broadcast %cst_5 : f32 to vector<1x1xf32>
    %10 = arith.addf %8, %9 : vector<1x1xf32>
    %cst_6 = arith.constant dense<0.000000e+00> : vector<32xf32>
    %11 = vector.multi_reduction <add>, %6, %cst_6 [0] : vector<8x32xf32> to vector<32xf32>
    %12 = vector.shape_cast %11 : vector<32xf32> to vector<1x32xf32>
    %13 = vector.broadcast %10 : vector<1x1xf32> to vector<1x32xf32>
    %14 = arith.divf %12, %13 : vector<1x32xf32>
    %c0_7 = arith.constant 0 : index
    %c0_8 = arith.constant 0 : index
    %c0_9 = arith.constant 0 : index
    %15 = vector.load %arg3[%c0_7, %c0_8, %c0_9] : memref<1x1x32xf32, #tpu.memory_space<vmem>>, vector<1x1x32xf32>
    %16 = vector.shape_cast %15 : vector<1x1x32xf32> to vector<1x32xf32>
    %17 = vector.shape_cast %14 : vector<1x32xf32> to vector<1x1x32xf32>
    tpu.vector_store %arg3[%c0_7, %c0_8, %c0_9], %17 {strides = array<i32>} : memref<1x1x32xf32, #tpu.memory_space<vmem>>, vector<1x1x32xf32>,
    %cst_10 = arith.constant 0.000000e+00 : f32
    %18 = vector.broadcast %cst_10 : f32 to vector<8x32xf32>
    %19 = arith.cmpf oeq, %6, %18 : vector<8x32xf32>
    %cst_11 = arith.constant 1.000000e+00 : f32
    %20 = vector.broadcast %cst_11 : f32 to vector<8x32xf32>
    %21 = arith.cmpf oeq, %6, %20 : vector<8x32xf32>
    %cst_12 = arith.constant 0.000000e+00 : f32
    %22 = vector.broadcast %cst_12 : f32 to vector<8x32xf32>
    %23 = arith.select %21, %22, %6 : vector<8x32xi1>, vector<8x32xf32>
    %cst_13 = arith.constant 0xFF800000 : f32
    %24 = vector.broadcast %cst_13 : f32 to vector<8x32xf32>
    %25 = arith.select %19, %24, %23 : vector<8x32xi1>, vector<8x32xf32>
    %26 = arith.addf %25, %2 : vector<8x32xf32>
    %cst_14 = arith.constant dense<0xFF800000> : vector<32xf32>
    %27 = vector.multi_reduction <maximumf>, %26, %cst_14 [0] : vector<8x32xf32> to vector<32xf32>
    %28 = vector.shape_cast %27 : vector<32xf32> to vector<1x32xf32>
    %c0_15 = arith.constant 0 : index
    %c0_16 = arith.constant 0 : index
    %c0_17 = arith.constant 0 : index
    %29 = vector.load %arg4[%c0_15, %c0_16, %c0_17] : memref<1x1x32xf32, #tpu.memory_space<vmem>>, vector<1x1x32xf32>
    %30 = vector.shape_cast %29 : vector<1x1x32xf32> to vector<1x32xf32>
    %31 = vector.shape_cast %28 : vector<1x32xf32> to vector<1x1x32xf32>
    tpu.vector_store %arg4[%c0_15, %c0_16, %c0_17], %31 {strides = array<i32>} : memref<1x1x32xf32, #tpu.memory_space<vmem>>, vector<1x1x32xf32>,
    return
  }
  func.func @transform_0(%arg0: i32) -> (i32, i32, i32) {
    %c0_i32 = arith.constant 0 : i32
    %c0_i32_0 = arith.constant 0 : i32
    %c0_i32_1 = arith.constant 0 : i32
    return %arg0, %c0_i32, %c0_i32_0 : i32, i32, i32
  }
  func.func @transform_1(%arg0: i32) -> (i32, i32, i32) {
    %c0_i32 = arith.constant 0 : i32
    %c0_i32_0 = arith.constant 0 : i32
    %c0_i32_1 = arith.constant 0 : i32
    return %arg0, %c0_i32, %c0_i32_0 : i32, i32, i32
  }
  func.func @transform_2(%arg0: i32) -> (i32, i32, i32) {
    %c0_i32 = arith.constant 0 : i32
    %c0_i32_0 = arith.constant 0 : i32
    %c0_i32_1 = arith.constant 0 : i32
    return %arg0, %c0_i32, %c0_i32_0 : i32, i32, i32
  }
  func.func @transform_3(%arg0: i32) -> (i32, i32, i32) {
    %c0_i32 = arith.constant 0 : i32
    %c0_i32_0 = arith.constant 0 : i32
    %c0_i32_1 = arith.constant 0 : i32
    return %arg0, %c0_i32, %c0_i32_0 : i32, i32, i32
  }
}

</mosaic_0001>

<llo_original>
// kernel: fwd.15
$region0: #{fwd.15}
  #allocation0 [shape = 'u32[]', space=smem, size = 0x4, offset = 0x4, fixed_abs, tag = 'smem constant byte address 0x4 - core index']
  #allocation1 [shape = 'u32[144,128]{1,0:T(1,128)}', space=vmem, size = 0x12000, scoped, tag = 'internal scratch']
  %s0 = inlined_call_operand.vmem [shape: bf16[16,32], index: 0, kind: input, shape index: {}]
  %s1 = inlined_call_operand.vmem [shape: bf16[32,32], index: 1, kind: input, shape index: {}]
  %s2 = inlined_call_operand.vmem [shape: f32[1,32], index: 2, kind: input, shape index: {}]
  %s3 = inlined_call_operand.vmem [shape: bf16[16,32], index: 3, kind: input, shape index: {}]
  %s4 = inlined_call_operand.vmem [shape: f32[1,32], index: 4, kind: input, shape index: {}]
  %s5 = inlined_call_operand.vmem [shape: f32[1,32], index: 5, kind: input, shape index: {}]
  %s6 = inlined_call_operand.vmem [shape: bf16[16,32], index: 6, kind: output, shape index: {}]
  %s7 = sld [smem:[#allocation0]]
  $region34: #{fwd.15} parent=0
    _
  %s9 = ssub.s32 1, %s7
  %s10 = scalar_select 0, %s9, %s7
  // Predicated region
  $region2: #{fwd.15} parent=0 // pred_check
    _
  $region3: #{fwd.15} parent=0 // pred_check_branch
    %12 = sbr.rel (0) target = $region5
  $region4: #{fwd.15} parent=0 // pred_region
    _
  $region5: #{fwd.15} parent=0 // pred_fallthru
    _
  // Predicated region
  $region6: #{fwd.15} parent=0 // pred_check
    _
  $region7: #{fwd.15} parent=0 // pred_check_branch
    %14 = sbr.rel (0) target = $region9
  $region8: #{fwd.15} parent=0 // pred_region
    _
  $region9: #{fwd.15} parent=0 // pred_fallthru
    _
  // Predicated region
  $region10: #{fwd.15} parent=0 // pred_check
    _
  $region11: #{fwd.15} parent=0 // pred_check_branch
    %16 = sbr.rel (0) target = $region13
  $region12: #{fwd.15} parent=0 // pred_region
    _
  $region13: #{fwd.15} parent=0 // pred_fallthru
    _
  // Predicated region
  $region14: #{fwd.15} parent=0 // pred_check
    _
  $region15: #{fwd.15} parent=0 // pred_check_branch
    %18 = sbr.rel (0) target = $region17
  $region16: #{fwd.15} parent=0 // pred_region
    _
  $region17: #{fwd.15} parent=0 // pred_fallthru
    _
  // Predicated region
  $region18: #{fwd.15} parent=0 // pred_check
    _
  $region19: #{fwd.15} parent=0 // pred_check_branch
    %20 = sbr.rel (0) target = $region21
  $region20: #{fwd.15} parent=0 // pred_region
    _
  $region21: #{fwd.15} parent=0 // pred_fallthru
    _
  // Predicated region
  $region22: #{fwd.15} parent=0 // pred_check
    _
  $region23: #{fwd.15} parent=0 // pred_check_branch
    %22 = sbr.rel (0) target = $region25
  $region24: #{fwd.15} parent=0 // pred_region
    _
  $region25: #{fwd.15} parent=0 // pred_fallthru
    _
  %v24 = vld [vmem:[%s0] sm:$0xf]
  %v25 = vld [vmem:[%s0 + $0x4] sm:$0xf]
  %v26 = vld [vmem:[%s1] sm:$0xf]
  %v27 = vld [vmem:[%s1 + $0x4] sm:$0xf]
  %v28 = vld [vmem:[%s1 + $0x8] sm:$0xf]
  %v29 = vld [vmem:[%s1 + $0xc] sm:$0xf]
  %v30 = vld [vmem:[%s2] sm:$0x1]
  %v32 = vlaneseq
  %v33 = vshrl.u32 %v32, 7
  %v34 = vsub.s32 0, %v33
  %v35 = vrot.slane %v30, %v34
  %v39 = vunpack.c.l.b16 %v24
  %v40 = vunpack.c.l.b16 %v25
  %v41 = vpack.c.b16 %v40, %v39
  %v46 = vunpack.c.l.b16 %v26
  %v47 = vunpack.c.l.b16 %v27
  %v48 = vunpack.c.l.b16 %v28
  %v49 = vunpack.c.l.b16 %v29
  %v50 = vpack.c.b16 %v47, %v46
  %v51 = vpack.c.b16 %v49, %v48
  %vm54 = vcmask 261120
  %v56 = vsel %vm54, %v41, 0
  %58 = vmatprep.subr.bf16.mxu0 0
  %59 = vmatpush1.bf16.msra.mxu0 %v50
  %60 = vmatprep.subr.bf16.mxu0 0
  %61 = vmatpush1.bf16.msra.mxu0 %v51
  %62 = vmatprep.subr.bf16.mxu0 0
  %63 = vmatpush1.bf16.msra.mxu0 0
  %64 = vmatprep.subr.bf16.mxu0 0
  %65 = vmatpush1.bf16.msra.mxu0 0
  %66 = vmatprep.subr.bf16.mxu0 0
  %67 = vmatpush1.bf16.msra.mxu0 0
  %68 = vmatprep.subr.bf16.mxu0 0
  %69 = vmatpush1.bf16.msra.mxu0 0
  %70 = vmatprep.subr.bf16.mxu0 0
  %71 = vmatpush1.bf16.msra.mxu0 0
  %72 = vmatprep.subr.bf16.mxu0 0
  %73 = vmatpush1.bf16.msra.mxu0 0
  %74 = vmatprep.subr.bf16.mxu0 0
  %75 = vmatpush1.bf16.msra.mxu0 0
  %76 = vmatprep.subr.bf16.mxu0 0
  %77 = vmatpush1.bf16.msra.mxu0 0
  %78 = vmatprep.subr.bf16.mxu0 0
  %79 = vmatpush1.bf16.msra.mxu0 0
  %80 = vmatprep.subr.bf16.mxu0 0
  %81 = vmatpush1.bf16.msra.mxu0 0
  %82 = vmatprep.subr.bf16.mxu0 0
  %83 = vmatpush1.bf16.msra.mxu0 0
  %84 = vmatprep.subr.bf16.mxu0 0
  %85 = vmatpush1.bf16.msra.mxu0 0
  %86 = vmatprep.subr.bf16.mxu0 0
  %87 = vmatpush1.bf16.msra.mxu0 0
  %88 = vmatprep.subr.bf16.mxu0 0
  %89 = vmatpush1.bf16.msra.mxu0 0
  %90 = vmatprep.mubr.bf16.mxu0 0
  %91 = vmatmul.mubr.bf16.gmra.mrb[0].mxu0 %v56
  %v92 = vpop.f32.mrb[0].mxu0
  %v93 = vadd.f32 %v35, %v92
  %v94 = vpop.f32.mrb[0].mxu0
  %v95 = vpop.f32.mrb[0].mxu0
  %v96 = vadd.f32 %v35, %v95
  %v97 = vpop.f32.mrb[0].mxu0
  %98 = vdwg.mxu0
  %v99 = vld [vmem:[%s3] sm:$0xf]
  %v100 = vld [vmem:[%s3 + $0x4] sm:$0xf]
  %v101 = vunpack.c.l.bf16 %v99
  %v102 = vunpack.c.l.bf16 %v100
  %v103 = vadd.f32 %v93, %v101
  %v104 = vadd.f32 %v96, %v102
  %v105 = vsel %vm54, %v103, 0.0
  %106 = vadd.xlane.f32.xlu0 %v105
  %v107 = vpop.xlane.xlu0 %106
  %v108 = vsel %vm54, %v104, 0.0
  %109 = vadd.xlane.f32.xlu0 %v108
  %v110 = vpop.xlane.xlu0 %109
  %v111 = vrcp.pop 32.0
  %v112 = vmul.f32 %v107, %v111
  %v113 = vmul.f32 %v110, %v111
  %v114 = vsub.f32 %v103, %v112
  %v115 = vsub.f32 %v104, %v113
  %v116 = vmul.f32 %v114, %v114
  %v117 = vmul.f32 %v115, %v115
  %v118 = vsel %vm54, %v116, 0.0
  %119 = vadd.xlane.f32.xlu0 %v118
  %v120 = vpop.xlane.xlu0 %119
  %v121 = vsel %vm54, %v117, 0.0
  %122 = vadd.xlane.f32.xlu0 %v121
  %v123 = vpop.xlane.xlu0 %122
  %v124 = vmul.f32 %v120, %v111
  %v125 = vmul.f32 %v123, %v111
  %v126 = vadd.f32 %v124, 1e-12
  %v127 = vadd.f32 %v125, 1e-12
  %v128 = vrsqrt.pop %v126
  %v129 = vrsqrt.pop %v127
  %v130 = vmul.f32 %v114, %v128
  %v131 = vmul.f32 %v115, %v129
  %v132 = vld [vmem:[%s4] sm:$0x1]
  %v134 = vlaneseq
  %v135 = vshrl.u32 %v134, 7
  %v136 = vsub.s32 0, %v135
  %v137 = vrot.slane %v132, %v136
  %v139 = vmul.f32 %v130, %v137
  %v140 = vmul.f32 %v131, %v137
  %v141 = vld [vmem:[%s5] sm:$0x1]
  %v143 = vlaneseq
  %v144 = vshrl.u32 %v143, 7
  %v145 = vsub.s32 0, %v144
  %v146 = vrot.slane %v141, %v145
  %v148 = vadd.f32 %v139, %v146
  %v149 = vadd.f32 %v140, %v146
  %v150 = vpack.c.bf16 %v149, %v148
  %v152 = vunpack.c.l.b16 %v150
  %v153 = vunpack.c.h.b16 %v150
  %v154 = vpack.c.b16 %v152, %v152
  %v155 = vpack.c.b16 %v153, %v153
  %vm158 = vcmask 257024
  %159 = vst.msk [vmem:[%s6] sm:$0xf] %vm158, %v154
  %160 = vst.msk [vmem:[%s6 + $0x4] sm:$0xf] %vm158, %v155
  // Predicated region
  $region26: #{fwd.15} parent=0 // pred_check
    _
  $region27: #{fwd.15} parent=0 // pred_check_branch
    %162 = sbr.rel (0) target = $region29
  $region28: #{fwd.15} parent=0 // pred_region
    _
  $region29: #{fwd.15} parent=0 // pred_fallthru
    _
  // Predicated region
  $region30: #{fwd.15} parent=0 // pred_check
    _
  $region31: #{fwd.15} parent=0 // pred_check_branch
    %164 = sbr.rel (0) target = $region33
  $region32: #{fwd.15} parent=0 // pred_region
    _
  $region33: #{fwd.15} parent=0 // pred_fallthru
    _

// kernel: fwd.13
$region0: #{fwd.13}
  #allocation0 [shape = 'u32[]', space=smem, size = 0x4, offset = 0x4, fixed_abs, tag = 'smem constant byte address 0x4 - core index']
  #allocation1 [shape = 'u32[144,128]{1,0:T(1,128)}', space=vmem, size = 0x12000, scoped, tag = 'internal scratch']
  %s0 = inlined_call_operand.vmem [shape: bf16[16,32], index: 0, kind: input, shape index: {}]
  %s1 = inlined_call_operand.vmem [shape: bf16[32,96], index: 1, kind: input, shape index: {}]
  %s2 = inlined_call_operand.vmem [shape: f32[1,96], index: 2, kind: input, shape index: {}]
  %s3 = inlined_call_operand.vmem [shape: bf16[16,96], index: 3, kind: output, shape index: {}]
  %s4 = sld [smem:[#allocation0]]
  $region22: #{fwd.13} parent=0
    _
  %s6 = ssub.s32 1, %s4
  %s7 = scalar_select 0, %s6, %s4
  // Predicated region
  $region2: #{fwd.13} parent=0 // pred_check
    _
  $region3: #{fwd.13} parent=0 // pred_check_branch
    %9 = sbr.rel (0) target = $region5
  $region4: #{fwd.13} parent=0 // pred_region
    _
  $region5: #{fwd.13} parent=0 // pred_fallthru
    _
  // Predicated region
  $region6: #{fwd.13} parent=0 // pred_check
    _
  $region7: #{fwd.13} parent=0 // pred_check_branch
    %11 = sbr.rel (0) target = $region9
  $region8: #{fwd.13} parent=0 // pred_region
    _
  $region9: #{fwd.13} parent=0 // pred_fallthru
    _
  // Predicated region
  $region10: #{fwd.13} parent=0 // pred_check
    _
  $region11: #{fwd.13} parent=0 // pred_check_branch
    %13 = sbr.rel (0) target = $region13
  $region12: #{fwd.13} parent=0 // pred_region
    _
  $region13: #{fwd.13} parent=0 // pred_fallthru
    _
  %v15 = vld [vmem:[%s0] sm:$0xf]
  %v16 = vld [vmem:[%s0 + $0x4] sm:$0xf]
  %v17 = vld [vmem:[%s1] sm:$0xf]
  %v18 = vld [vmem:[%s1 + $0x4] sm:$0xf]
  %v19 = vld [vmem:[%s1 + $0x8] sm:$0xf]
  %v20 = vld [vmem:[%s1 + $0xc] sm:$0xf]
  %v21 = vld [vmem:[%s2] sm:$0x1]
  %v23 = vlaneseq
  %v24 = vshrl.u32 %v23, 7
  %v25 = vsub.s32 0, %v24
  %v26 = vrot.slane %v21, %v25
  %v30 = vunpack.c.l.b16 %v15
  %v31 = vunpack.c.l.b16 %v16
  %v32 = vpack.c.b16 %v31, %v30
  %v37 = vunpack.c.l.b16 %v17
  %v38 = vunpack.c.l.b16 %v18
  %v39 = vunpack.c.l.b16 %v19
  %v40 = vunpack.c.l.b16 %v20
  %v41 = vpack.c.b16 %v38, %v37
  %v42 = vpack.c.b16 %v40, %v39
  %vm45 = vcmask 261120
  %v47 = vsel %vm45, %v32, 0
  %49 = vmatprep.subr.bf16.mxu0 0
  %50 = vmatpush1.bf16.msra.mxu0 %v41
  %51 = vmatprep.subr.bf16.mxu0 0
  %52 = vmatpush1.bf16.msra.mxu0 %v42
  %53 = vmatprep.subr.bf16.mxu0 0
  %54 = vmatpush1.bf16.msra.mxu0 0
  %55 = vmatprep.subr.bf16.mxu0 0
  %56 = vmatpush1.bf16.msra.mxu0 0
  %57 = vmatprep.subr.bf16.mxu0 0
  %58 = vmatpush1.bf16.msra.mxu0 0
  %59 = vmatprep.subr.bf16.mxu0 0
  %60 = vmatpush1.bf16.msra.mxu0 0
  %61 = vmatprep.subr.bf16.mxu0 0
  %62 = vmatpush1.bf16.msra.mxu0 0
  %63 = vmatprep.subr.bf16.mxu0 0
  %64 = vmatpush1.bf16.msra.mxu0 0
  %65 = vmatprep.subr.bf16.mxu0 0
  %66 = vmatpush1.bf16.msra.mxu0 0
  %67 = vmatprep.subr.bf16.mxu0 0
  %68 = vmatpush1.bf16.msra.mxu0 0
  %69 = vmatprep.subr.bf16.mxu0 0
  %70 = vmatpush1.bf16.msra.mxu0 0
  %71 = vmatprep.subr.bf16.mxu0 0
  %72 = vmatpush1.bf16.msra.mxu0 0
  %73 = vmatprep.subr.bf16.mxu0 0
  %74 = vmatpush1.bf16.msra.mxu0 0
  %75 = vmatprep.subr.bf16.mxu0 0
  %76 = vmatpush1.bf16.msra.mxu0 0
  %77 = vmatprep.subr.bf16.mxu0 0
  %78 = vmatpush1.bf16.msra.mxu0 0
  %79 = vmatprep.subr.bf16.mxu0 0
  %80 = vmatpush1.bf16.msra.mxu0 0
  %81 = vmatprep.mubr.bf16.mxu0 0
  %82 = vmatmul.mubr.bf16.gmra.mrb[0].mxu0 %v47
  %v83 = vpop.f32.mrb[0].mxu0
  %v84 = vadd.f32 %v26, %v83
  %v85 = vpop.f32.mrb[0].mxu0
  %v86 = vpop.f32.mrb[0].mxu0
  %v87 = vadd.f32 %v26, %v86
  %v88 = vpop.f32.mrb[0].mxu0
  %89 = vdwg.mxu0
  %v90 = vpack.c.bf16 %v87, %v84
  %v92 = vunpack.c.l.b16 %v90
  %v93 = vunpack.c.h.b16 %v90
  %v94 = vpack.c.b16 %v92, %v92
  %v95 = vpack.c.b16 %v93, %v93
  %vm98 = vcmask 781312
  %99 = vst.msk [vmem:[%s3] sm:$0xf] %vm98, %v94
  %100 = vst.msk [vmem:[%s3 + $0x4] sm:$0xf] %vm98, %v95
  // Predicated region
  $region14: #{fwd.13} parent=0 // pred_check
    _
  $region15: #{fwd.13} parent=0 // pred_check_branch
    %102 = sbr.rel (0) target = $region17
  $region16: #{fwd.13} parent=0 // pred_region
    _
  $region17: #{fwd.13} parent=0 // pred_fallthru
    _
  // Predicated region
  $region18: #{fwd.13} parent=0 // pred_check
    _
  $region19: #{fwd.13} parent=0 // pred_check_branch
    %104 = sbr.rel (0) target = $region21
  $region20: #{fwd.13} parent=0 // pred_region
    _
  $region21: #{fwd.13} parent=0 // pred_fallthru
    _

// kernel: fwd.12
$region0: #{fwd.12}
  #allocation0 [shape = 'u32[]', space=smem, size = 0x4, offset = 0x4, fixed_abs, tag = 'smem constant byte address 0x4 - core index']
  #allocation1 [shape = 'u32[144,128]{1,0:T(1,128)}', space=vmem, size = 0x12000, scoped, tag = 'internal scratch']
  %s0 = inlined_call_operand.vmem [shape: bf16[16,32], index: 0, kind: input, shape index: {}]
  %s1 = inlined_call_operand.vmem [shape: f32[1,32], index: 1, kind: input, shape index: {}]
  %s2 = inlined_call_operand.vmem [shape: f32[1,32], index: 2, kind: input, shape index: {}]
  %s3 = inlined_call_operand.vmem [shape: bf16[16,32], index: 3, kind: output, shape index: {}]
  %s4 = sld [smem:[#allocation0]]
  $region22: #{fwd.12} parent=0
    _
  %s6 = ssub.s32 1, %s4
  %s7 = scalar_select 0, %s6, %s4
  // Predicated region
  $region2: #{fwd.12} parent=0 // pred_check
    _
  $region3: #{fwd.12} parent=0 // pred_check_branch
    %9 = sbr.rel (0) target = $region5
  $region4: #{fwd.12} parent=0 // pred_region
    _
  $region5: #{fwd.12} parent=0 // pred_fallthru
    _
  // Predicated region
  $region6: #{fwd.12} parent=0 // pred_check
    _
  $region7: #{fwd.12} parent=0 // pred_check_branch
    %11 = sbr.rel (0) target = $region9
  $region8: #{fwd.12} parent=0 // pred_region
    _
  $region9: #{fwd.12} parent=0 // pred_fallthru
    _
  // Predicated region
  $region10: #{fwd.12} parent=0 // pred_check
    _
  $region11: #{fwd.12} parent=0 // pred_check_branch
    %13 = sbr.rel (0) target = $region13
  $region12: #{fwd.12} parent=0 // pred_region
    _
  $region13: #{fwd.12} parent=0 // pred_fallthru
    _
  %v14 = vld [vmem:[%s0] sm:$0xf]
  %v15 = vld [vmem:[%s0 + $0x4] sm:$0xf]
  %v16 = vunpack.c.l.bf16 %v14
  %v17 = vunpack.c.l.bf16 %v15
  %vm18 = vcmask 261120
  %v19 = vsel %vm18, %v16, 0.0
  %20 = vadd.xlane.f32.xlu0 %v19
  %v21 = vpop.xlane.xlu0 %20
  %v22 = vsel %vm18, %v17, 0.0
  %23 = vadd.xlane.f32.xlu0 %v22
  %v24 = vpop.xlane.xlu0 %23
  %v25 = vrcp.pop 32.0
  %v26 = vmul.f32 %v21, %v25
  %v27 = vmul.f32 %v24, %v25
  %v28 = vsub.f32 %v16, %v26
  %v29 = vsub.f32 %v17, %v27
  %v30 = vmul.f32 %v28, %v28
  %v31 = vmul.f32 %v29, %v29
  %v32 = vsel %vm18, %v30, 0.0
  %33 = vadd.xlane.f32.xlu0 %v32
  %v34 = vpop.xlane.xlu0 %33
  %v35 = vsel %vm18, %v31, 0.0
  %36 = vadd.xlane.f32.xlu0 %v35
  %v37 = vpop.xlane.xlu0 %36
  %v38 = vmul.f32 %v34, %v25
  %v39 = vmul.f32 %v37, %v25
  %v40 = vadd.f32 %v38, 1e-12
  %v41 = vadd.f32 %v39, 1e-12
  %v42 = vrsqrt.pop %v40
  %v43 = vrsqrt.pop %v41
  %v44 = vmul.f32 %v28, %v42
  %v45 = vmul.f32 %v29, %v43
  %v46 = vld [vmem:[%s1] sm:$0x1]
  %v48 = vlaneseq
  %v49 = vshrl.u32 %v48, 7
  %v50 = vsub.s32 0, %v49
  %v51 = vrot.slane %v46, %v50
  %v53 = vmul.f32 %v44, %v51
  %v54 = vmul.f32 %v45, %v51
  %v55 = vld [vmem:[%s2] sm:$0x1]
  %v57 = vlaneseq
  %v58 = vshrl.u32 %v57, 7
  %v59 = vsub.s32 0, %v58
  %v60 = vrot.slane %v55, %v59
  %v62 = vadd.f32 %v53, %v60
  %v63 = vadd.f32 %v54, %v60
  %v64 = vpack.c.bf16 %v63, %v62
  %v66 = vunpack.c.l.b16 %v64
  %v67 = vunpack.c.h.b16 %v64
  %v68 = vpack.c.b16 %v66, %v66
  %v69 = vpack.c.b16 %v67, %v67
  %vm72 = vcmask 257024
  %73 = vst.msk [vmem:[%s3] sm:$0xf] %vm72, %v68
  %74 = vst.msk [vmem:[%s3 + $0x4] sm:$0xf] %vm72, %v69
  // Predicated region
  $region14: #{fwd.12} parent=0 // pred_check
    _
  $region15: #{fwd.12} parent=0 // pred_check_branch
    %76 = sbr.rel (0) target = $region17
  $region16: #{fwd.12} parent=0 // pred_region
    _
  $region17: #{fwd.12} parent=0 // pred_fallthru
    _
  // Predicated region
  $region18: #{fwd.12} parent=0 // pred_check
    _
  $region19: #{fwd.12} parent=0 // pred_check_branch
    %78 = sbr.rel (0) target = $region21
  $region20: #{fwd.12} parent=0 // pred_region
    _
  $region21: #{fwd.12} parent=0 // pred_fallthru
    _

// kernel: fwd.14
$region0: #{fwd.14}
  #allocation0 [shape = 'u32[]', space=smem, size = 0x4, offset = 0x4, fixed_abs, tag = 'smem constant byte address 0x4 - core index']
  #allocation1 [shape = 'u32[144,128]{1,0:T(1,128)}', space=vmem, size = 0x12000, scoped, tag = 'internal scratch']
  %s0 = inlined_call_operand.vmem [shape: bf16[2,8,96], index: 0, kind: input, shape index: {}]
  %s1 = inlined_call_operand.vmem [shape: bf16[4,32], index: 1, kind: input, shape index: {}]
  %s2 = inlined_call_operand.vmem [shape: bf16[4,32], index: 2, kind: input, shape index: {}]
  %s3 = inlined_call_operand.vmem [shape: f32[2,1,8], index: 3, kind: input, shape index: {}]
  %s4 = inlined_call_operand.vmem [shape: bf16[2,8,32], index: 4, kind: output, shape index: {}]
  %s5 = sld [smem:[#allocation0]]
  $region49: #{fwd.14} parent=0
    _
  %s7 = ssub.s32 1, %s5
  %s8 = scalar_select 0, %s7, %s5
  loop: start=0, step=1, limit=4
  $region2: #{fwd.14} parent=0 // loop_pre_header
    _
  $region3: #{fwd.14} parent=0 // loop_header
    %s10 = sphi 0, %s14
    %p11 = scmp.ge.s32.totalorder %s10, 4
    %s20 = sphi 0, %s22
    %s23 = sphi 0, %s20
    %s24 = sphi 0, %s23
    %s40 = sphi 0, %s24
    %s44 = sphi 0, %s44
    %s46 = sphi 0, %s44
    %s47 = sphi 0, %s46
    %s61 = sphi 0, %s47
    %s65 = sphi 0, %s65
    %s67 = sphi 0, %s65
    %s68 = sphi 0, %s67
    %s82 = sphi 0, %s68
    %s88 = sphi 0, %s90
    %s91 = sphi 0, %s88
    %s92 = sphi 0, %s91
    %s108 = sphi 0, %s92
    %s114 = sphi 0, %s116
    %s117 = sphi 0, %s114
    %s118 = sphi 0, %s117
    %s134 = sphi 0, %s118
  $region4: #{fwd.14} parent=0 // loop_header_branch
    %13 = sbr.rel (%p11) target = $region8
  $region5: #{fwd.14} parent=0 // loop_body
    %s15 = ssub.s32 %s10, 1
    %s16 = ssub.s32 %s10, 2
    %s17 = sadd.s32 %s10, 1
    %s18 = ssub.s32 %s10, %s17
    %p19 = scmp.eq.s32.totalorder %s18, 0
    %s21 = sadd.s32 %s20, 1
    %s22 = scalar_select %p19, %s20, %s21
    %p25 = pneg %p19
    %p26 = scmp.eq.s32.totalorder %s10, 1
    %p27 = por %p25, %p26
    %p28 = scmp.ne.s32.totalorder %s20, %s23
    %p29 = scmp.eq.s32.totalorder %s10, 0
    %p30 = por %p28, %p29
    %p31 = scmp.ne.s32.totalorder %s20, %s23
    %p32 = scmp.eq.s32.totalorder %s15, 1
    %p33 = por %p31, %p32
    %p34 = scmp.ne.s32.totalorder %s23, %s24
    %p35 = scmp.eq.s32.totalorder %s15, 0
    %p36 = por %p34, %p35
    %p37 = scmp.ne.s32.totalorder %s23, %s24
    %p38 = scmp.eq.s32.totalorder %s16, 1
    %p39 = por %p37, %p38
    %p41 = scmp.ne.s32.totalorder %s24, %s40
    %p42 = scmp.eq.s32.totalorder %s16, 0
    %p43 = por %p41, %p42
    %s45 = sadd.s32 %s44, 1
    %p48 = scmp.eq.s32.totalorder %s10, 1
    %p49 = scmp.ne.s32.totalorder %s44, %s46
    %p50 = scmp.eq.s32.totalorder %s10, 0
    %p51 = por %p49, %p50
    %p52 = scmp.ne.s32.totalorder %s44, %s46
    %p53 = scmp.eq.s32.totalorder %s15, 1
    %p54 = por %p52, %p53
    %p55 = scmp.ne.s32.totalorder %s46, %s47
    %p56 = scmp.eq.s32.totalorder %s15, 0
    %p57 = por %p55, %p56
    %p58 = scmp.ne.s32.totalorder %s46, %s47
    %p59 = scmp.eq.s32.totalorder %s16, 1
    %p60 = por %p58, %p59
    %p62 = scmp.ne.s32.totalorder %s47, %s61
    %p63 = scmp.eq.s32.totalorder %s16, 0
    %p64 = por %p62, %p63
    %s66 = sadd.s32 %s65, 1
    %p69 = scmp.eq.s32.totalorder %s10, 1
    %p70 = scmp.ne.s32.totalorder %s65, %s67
    %p71 = scmp.eq.s32.totalorder %s10, 0
    %p72 = por %p70, %p71
    %p73 = scmp.ne.s32.totalorder %s65, %s67
    %p74 = scmp.eq.s32.totalorder %s15, 1
    %p75 = por %p73, %p74
    %p76 = scmp.ne.s32.totalorder %s67, %s68
    %p77 = scmp.eq.s32.totalorder %s15, 0
    %p78 = por %p76, %p77
    %p79 = scmp.ne.s32.totalorder %s67, %s68
    %p80 = scmp.eq.s32.totalorder %s16, 1
    %p81 = por %p79, %p80
    %p83 = scmp.ne.s32.totalorder %s68, %s82
    %p84 = scmp.eq.s32.totalorder %s16, 0
    %p85 = por %p83, %p84
    %s86 = ssub.s32 %s10, %s17
    %p87 = scmp.eq.s32.totalorder %s86, 0
    %s89 = sadd.s32 %s88, 1
    %s90 = scalar_select %p87, %s88, %s89
    %p93 = pneg %p87
    %p94 = scmp.eq.s32.totalorder %s10, 1
    %p95 = por %p93, %p94
    %p96 = scmp.ne.s32.totalorder %s88, %s91
    %p97 = scmp.eq.s32.totalorder %s10, 0
    %p98 = por %p96, %p97
    %p99 = scmp.ne.s32.totalorder %s88, %s91
    %p100 = scmp.eq.s32.totalorder %s15, 1
    %p101 = por %p99, %p100
    %p102 = scmp.ne.s32.totalorder %s91, %s92
    %p103 = scmp.eq.s32.totalorder %s15, 0
    %p104 = por %p102, %p103
    %p105 = scmp.ne.s32.totalorder %s91, %s92
    %p106 = scmp.eq.s32.totalorder %s16, 1
    %p107 = por %p105, %p106
    %p109 = scmp.ne.s32.totalorder %s92, %s108
    %p110 = scmp.eq.s32.totalorder %s16, 0
    %p111 = por %p109, %p110
    %s112 = ssub.s32 %s10, %s17
    %p113 = scmp.eq.s32.totalorder %s112, 0
    %s115 = sadd.s32 %s114, 1
    %s116 = scalar_select %p113, %s114, %s115
    %p119 = pneg %p113
    %p120 = scmp.eq.s32.totalorder %s10, 1
    %p121 = por %p119, %p120
    %p122 = scmp.ne.s32.totalorder %s114, %s117
    %p123 = scmp.eq.s32.totalorder %s10, 0
    %p124 = por %p122, %p123
    %p125 = scmp.ne.s32.totalorder %s114, %s117
    %p126 = scmp.eq.s32.totalorder %s15, 1
    %p127 = por %p125, %p126
    %p128 = scmp.ne.s32.totalorder %s117, %s118
    %p129 = scmp.eq.s32.totalorder %s15, 0
    %p130 = por %p128, %p129
    %p131 = scmp.ne.s32.totalorder %s117, %s118
    %p132 = scmp.eq.s32.totalorder %s16, 1
    %p133 = por %p131, %p132
    %p135 = scmp.ne.s32.totalorder %s118, %s134
    %p136 = scmp.eq.s32.totalorder %s16, 0
    %p137 = por %p135, %p136
    %p138 = scmp.le.s32.totalorder 1, %s10
    %p139 = scmp.lt.s32.totalorder %s10, 3
    %p140 = pnand %p138, %p139
    %p141 = pneg %p140
    // Predicated region
    $region9: #{fwd.14} parent=5 // pred_check
      _
    $region10: #{fwd.14} parent=5 // pred_check_branch
      %143 = sbr.rel (%p140) target = $region12
    $region11: #{fwd.14} parent=5 // pred_region
      %s144 = ssub.s32 %s10, 1
      // Predicated region
      $region13: #{fwd.14} parent=11 // pred_check
        %p145 = pneg %p57
      $region14: #{fwd.14} parent=11 // pred_check_branch
        %147 = sbr.rel (%p145) target = $region16
      $region15: #{fwd.14} parent=11 // pred_region
        _
      $region16: #{fwd.14} parent=11 // pred_fallthru
        _
      // Predicated region
      $region17: #{fwd.14} parent=11 // pred_check
        %p148 = pneg %p78
      $region18: #{fwd.14} parent=11 // pred_check_branch
        %150 = sbr.rel (%p148) target = $region20
      $region19: #{fwd.14} parent=11 // pred_region
        _
      $region20: #{fwd.14} parent=11 // pred_fallthru
        _
    $region12: #{fwd.14} parent=5 // pred_fallthru
      _
    %p151 = scmp.lt.s32.totalorder %s10, 2
    // Predicated region
    $region21: #{fwd.14} parent=5 // pred_check
      %p152 = pneg %p151
    $region22: #{fwd.14} parent=5 // pred_check_branch
      %154 = sbr.rel (%p152) target = $region24
    $region23: #{fwd.14} parent=5 // pred_region
      // Predicated region
      $region25: #{fwd.14} parent=23 // pred_check
        %p155 = pneg %p30
      $region26: #{fwd.14} parent=23 // pred_check_branch
        %157 = sbr.rel (%p155) target = $region28
      $region27: #{fwd.14} parent=23 // pred_region
        %p158 = scmp.lt.s32.totalorder %s10, 1
        %s159 = scalar_select %p158, %s10, 1
        %s160 = smul.addr %s159, 4
        %s161 = scalar_lea.vmem %s0, %s160
      $region28: #{fwd.14} parent=23 // pred_fallthru
        _
      // Predicated region
      $region29: #{fwd.14} parent=23 // pred_check
        %p162 = pneg %p98
      $region30: #{fwd.14} parent=23 // pred_check_branch
        %164 = sbr.rel (%p162) target = $region32
      $region31: #{fwd.14} parent=23 // pred_region
        %p165 = scmp.lt.s32.totalorder %s10, 1
        %s166 = scalar_select %p165, %s10, 1
        %s167 = scalar_lea.vmem %s3, %s166
      $region32: #{fwd.14} parent=23 // pred_fallthru
        _
    $region24: #{fwd.14} parent=5 // pred_fallthru
      _
    %p168 = scmp.le.s32.totalorder 1, %s10
    %p169 = scmp.lt.s32.totalorder %s10, 3
    %p170 = pnand %p168, %p169
    %p171 = pneg %p170
    // Predicated region
    $region33: #{fwd.14} parent=5 // pred_check
      _
    $region34: #{fwd.14} parent=5 // pred_check_branch
      %173 = sbr.rel (%p170) target = $region36
    $region35: #{fwd.14} parent=5 // pred_region
      %s174 = ssub.s32 %s10, 1
      %p175 = scmp.lt.s32.totalorder %s15, 1
      %s176 = scalar_select %p175, %s15, 1
      %s177 = smul.addr %s176, 4
      %s178 = scalar_lea.vmem %s0, %s177
      %p179 = pneg %p36
      %p180 = pneg %p33
      %p181 = pneg %p57
      %p182 = pneg %p54
      %p183 = pneg %p78
      %p184 = pneg %p75
      %p185 = scmp.lt.s32.totalorder %s15, 1
      %s186 = scalar_select %p185, %s15, 1
      %s187 = scalar_lea.vmem %s3, %s186
      %p188 = pneg %p104
      %p189 = pneg %p101
      %p190 = pneg %p130
      %p191 = pneg %p127
      %p192 = scmp.lt.s32.totalorder %s15, 1
      %s193 = scalar_select %p192, %s15, 1
      %s194 = smul.addr %s193, 4
      %s195 = scalar_lea.vmem %s4, %s194
      %p196 = scmp.lt.s32.totalorder %s15, 1
      %s197 = scalar_select %p196, %s15, 1
      %s198 = smul.addr %s197, 4
      %s199 = scalar_lea.vmem %s0, %s198
      %p200 = scmp.lt.s32.totalorder %s15, 1
      %s201 = scalar_select %p200, %s15, 1
      %s202 = scalar_lea.vmem %s3, %s201
      %p203 = scmp.lt.s32.totalorder %s15, 1
      %s204 = scalar_select %p203, %s15, 1
      %s205 = smul.addr %s204, 4
      %s206 = scalar_lea.vmem %s4, %s205
      %v209 = vld [vmem:[%s202] sm:$0x1]
      %v210 = vld [vmem:[%s199] sm:$0xf]
      %v211 = vmul.bf16 %v210, 1048592000
      %v212 = vld [vmem:[%s1] sm:$0x3]
      %v213 = vld [vmem:[%s2] sm:$0x3]
      %vm214 = vcmask 130048
      %v216 = vsel %vm214, %v211, 0
      %v219 = vsel %vm214, %v212, 0
      %221 = vmatprep.subr.bf16.mxu0 0
      %222 = vmatpush1.bf16.xpose.msra.mxu0 %v219
      %223 = vmatprep.subr.bf16.mxu0 0
      %224 = vmatpush1.bf16.xpose.msra.mxu0 0
      %225 = vmatprep.subr.bf16.mxu0 0
      %226 = vmatpush1.bf16.xpose.msra.mxu0 0
      %227 = vmatprep.subr.bf16.mxu0 0
      %228 = vmatpush1.bf16.xpose.msra.mxu0 0
      %229 = vmatprep.subr.bf16.mxu0 0
      %230 = vmatpush1.bf16.xpose.msra.mxu0 0
      %231 = vmatprep.subr.bf16.mxu0 0
      %232 = vmatpush1.bf16.xpose.msra.mxu0 0
      %233 = vmatprep.subr.bf16.mxu0 0
      %234 = vmatpush1.bf16.xpose.msra.mxu0 0
      %235 = vmatprep.subr.bf16.mxu0 0
      %236 = vmatpush1.bf16.xpose.msra.mxu0 0
      %237 = vmatprep.subr.bf16.mxu0 0
      %238 = vmatpush1.bf16.xpose.msra.mxu0 0
      %239 = vmatprep.subr.bf16.mxu0 0
      %240 = vmatpush1.bf16.xpose.msra.mxu0 0
      %241 = vmatprep.subr.bf16.mxu0 0
      %242 = vmatpush1.bf16.xpose.msra.mxu0 0
      %243 = vmatprep.subr.bf16.mxu0 0
      %244 = vmatpush1.bf16.xpose.msra.mxu0 0
      %245 = vmatprep.subr.bf16.mxu0 0
      %246 = vmatpush1.bf16.xpose.msra.mxu0 0
      %247 = vmatprep.subr.bf16.mxu0 0
      %248 = vmatpush1.bf16.xpose.msra.mxu0 0
      %249 = vmatprep.subr.bf16.mxu0 0
      %250 = vmatpush1.bf16.xpose.msra.mxu0 0
      %251 = vmatprep.subr.bf16.mxu0 0
      %252 = vmatpush1.bf16.xpose.msra.mxu0 0
      %253 = vmatprep.mubr.bf16.mxu0 0
      %254 = vmatmul.mubr.bf16.gmra.mrb[0].mxu0 %v216
      %v255 = vpop.f32.mrb[0].mxu0
      %v256 = vadd.f32 0.0, %v255
      %v257 = vpop.f32.mrb[0].mxu0
      %v258 = vpop.f32.mrb[0].mxu0
      %v259 = vpop.f32.mrb[0].mxu0
      %260 = vdwg.mxu0
      %v262 = vlaneseq
      %v263 = vshrl.u32 %v262, 7
      %v264 = vsub.s32 0, %v263
      %v265 = vrot.slane %v209, %v264
      %v268 = vunpack.c.l.b16 %v210
      %v269 = vpack.c.b16 %v268, %v268
      %270 = vrot.lane.b32.xlu0 %v269, 96
      %v271 = vpop.permute.xlu0 %270
      %v273 = vsel %vm214, %v271, 0
      %275 = vmatprep.subr.bf16.mxu0 0
      %276 = vmatpush1.bf16.xpose.msra.mxu0 %v273
      %277 = vmatprep.subr.bf16.mxu0 0
      %278 = vmatpush1.bf16.xpose.msra.mxu0 0
      %279 = vmatprep.subr.bf16.mxu0 0
      %280 = vmatpush1.bf16.xpose.msra.mxu0 0
      %281 = vmatprep.subr.bf16.mxu0 0
      %282 = vmatpush1.bf16.xpose.msra.mxu0 0
      %283 = vmatprep.subr.bf16.mxu0 0
      %284 = vmatpush1.bf16.xpose.msra.mxu0 0
      %285 = vmatprep.subr.bf16.mxu0 0
      %286 = vmatpush1.bf16.xpose.msra.mxu0 0
      %287 = vmatprep.subr.bf16.mxu0 0
      %288 = vmatpush1.bf16.xpose.msra.mxu0 0
      %289 = vmatprep.subr.bf16.mxu0 0
      %290 = vmatpush1.bf16.xpose.msra.mxu0 0
      %291 = vmatprep.subr.bf16.mxu0 0
      %292 = vmatpush1.bf16.xpose.msra.mxu0 0
      %293 = vmatprep.subr.bf16.mxu0 0
      %294 = vmatpush1.bf16.xpose.msra.mxu0 0
      %295 = vmatprep.subr.bf16.mxu0 0
      %296 = vmatpush1.bf16.xpose.msra.mxu0 0
      %297 = vmatprep.subr.bf16.mxu0 0
      %298 = vmatpush1.bf16.xpose.msra.mxu0 0
      %299 = vmatprep.subr.bf16.mxu0 0
      %300 = vmatpush1.bf16.xpose.msra.mxu0 0
      %301 = vmatprep.subr.bf16.mxu0 0
      %302 = vmatpush1.bf16.xpose.msra.mxu0 0
      %303 = vmatprep.subr.bf16.mxu0 0
      %304 = vmatpush1.bf16.xpose.msra.mxu0 0
      %305 = vmatprep.subr.bf16.mxu0 0
      %306 = vmatpush1.bf16.xpose.msra.mxu0 0
      %307 = vmatprep.mubr.bf16.mxu0 0
      %308 = vmatmul.mubr.bf16.gmra.mrb[0].mxu0 %v216
      %v309 = vpop.f32.mrb[0].mxu0
      %v310 = vadd.f32 %v265, %v309
      %v311 = vpop.f32.mrb[0].mxu0
      %v312 = vpop.f32.mrb[0].mxu0
      %v313 = vpop.f32.mrb[0].mxu0
      %314 = vdwg.mxu0
      %vm315 = vcmask 31744
      %v316 = vsel %vm315, %v256, -inf
      %317 = vmax.xlane.f32.xlu0 %v316
      %v318 = vpop.xlane.xlu0 %317
      %vm319 = vcmask 64512
      %v320 = vsel %vm319, %v310, -inf
      %321 = vmax.xlane.f32.xlu0 %v320
      %v322 = vpop.xlane.xlu0 %321
      %v323 = vmax.f32 %v318, %v322
      %v324 = vsub.f32 %v256, %v323
      %v325 = vmul.f32 %v324, 1.442695
      %v326 = vpow.pop %v325
      %v327 = vsub.f32 %v310, %v323
      %v328 = vmul.f32 %v327, 1.442695
      %v329 = vpow.pop %v328
      %v330 = vsel %vm315, %v326, 0.0
      %331 = vadd.xlane.f32.xlu0 %v330
      %v332 = vpop.xlane.xlu0 %331
      %v333 = vsel %vm319, %v329, 0.0
      %334 = vadd.xlane.f32.xlu0 %v333
      %v335 = vpop.xlane.xlu0 %334
      %v336 = vadd.f32 %v332, %v335
      %v337 = vpack.c.bf16 %v326, %v326
      %v338 = vpack.c.bf16 %v329, %v329
      %339 = vrot.lane.b32.xlu0 %v269, 64
      %v340 = vpop.permute.xlu0 %339
      %v342 = vsel %vm319, %v338, 0
      %vm344 = vcmask 1043456
      %v346 = vsel %vm344, %v340, 0
      %348 = vmatprep.subr.bf16.mxu0 0
      %349 = vmatpush1.bf16.msra.mxu0 %v346
      %350 = vmatprep.subr.bf16.mxu0 0
      %351 = vmatpush1.bf16.msra.mxu0 0
      %352 = vmatprep.subr.bf16.mxu0 0
      %353 = vmatpush1.bf16.msra.mxu0 0
      %354 = vmatprep.subr.bf16.mxu0 0
      %355 = vmatpush1.bf16.msra.mxu0 0
      %356 = vmatprep.subr.bf16.mxu0 0
      %357 = vmatpush1.bf16.msra.mxu0 0
      %358 = vmatprep.subr.bf16.mxu0 0
      %359 = vmatpush1.bf16.msra.mxu0 0
      %360 = vmatprep.subr.bf16.mxu0 0
      %361 = vmatpush1.bf16.msra.mxu0 0
      %362 = vmatprep.subr.bf16.mxu0 0
      %363 = vmatpush1.bf16.msra.mxu0 0
      %364 = vmatprep.subr.bf16.mxu0 0
      %365 = vmatpush1.bf16.msra.mxu0 0
      %366 = vmatprep.subr.bf16.mxu0 0
      %367 = vmatpush1.bf16.msra.mxu0 0
      %368 = vmatprep.subr.bf16.mxu0 0
      %369 = vmatpush1.bf16.msra.mxu0 0
      %370 = vmatprep.subr.bf16.mxu0 0
      %371 = vmatpush1.bf16.msra.mxu0 0
      %372 = vmatprep.subr.bf16.mxu0 0
      %373 = vmatpush1.bf16.msra.mxu0 0
      %374 = vmatprep.subr.bf16.mxu0 0
      %375 = vmatpush1.bf16.msra.mxu0 0
      %376 = vmatprep.subr.bf16.mxu0 0
      %377 = vmatpush1.bf16.msra.mxu0 0
      %378 = vmatprep.subr.bf16.mxu0 0
      %379 = vmatpush1.bf16.msra.mxu0 0
      %380 = vmatprep.mubr.bf16.mxu0 0
      %381 = vmatmul.mubr.bf16.gmra.mrb[0].mxu0 %v342
      %v382 = vpop.f32.mrb[0].mxu0
      %v383 = vadd.f32 0.0, %v382
      %v384 = vpop.f32.mrb[0].mxu0
      %v385 = vpop.f32.mrb[0].mxu0
      %v386 = vpop.f32.mrb[0].mxu0
      %387 = vdwg.mxu0
      %v389 = vsel %vm315, %v337, 0
      %vm391 = vcmask 1041408
      %v393 = vsel %vm391, %v213, 0
      %395 = vmatprep.subr.bf16.mxu0 0
      %396 = vmatpush1.bf16.msra.mxu0 %v393
      %397 = vmatprep.subr.bf16.mxu0 0
      %398 = vmatpush1.bf16.msra.mxu0 0
      %399 = vmatprep.subr.bf16.mxu0 0
      %400 = vmatpush1.bf16.msra.mxu0 0
      %401 = vmatprep.subr.bf16.mxu0 0
      %402 = vmatpush1.bf16.msra.mxu0 0
      %403 = vmatprep.subr.bf16.mxu0 0
      %404 = vmatpush1.bf16.msra.mxu0 0
      %405 = vmatprep.subr.bf16.mxu0 0
      %406 = vmatpush1.bf16.msra.mxu0 0
      %407 = vmatprep.subr.bf16.mxu0 0
      %408 = vmatpush1.bf16.msra.mxu0 0
      %409 = vmatprep.subr.bf16.mxu0 0
      %410 = vmatpush1.bf16.msra.mxu0 0
      %411 = vmatprep.subr.bf16.mxu0 0
      %412 = vmatpush1.bf16.msra.mxu0 0
      %413 = vmatprep.subr.bf16.mxu0 0
      %414 = vmatpush1.bf16.msra.mxu0 0
      %415 = vmatprep.subr.bf16.mxu0 0
      %416 = vmatpush1.bf16.msra.mxu0 0
      %417 = vmatprep.subr.bf16.mxu0 0
      %418 = vmatpush1.bf16.msra.mxu0 0
      %419 = vmatprep.subr.bf16.mxu0 0
      %420 = vmatpush1.bf16.msra.mxu0 0
      %421 = vmatprep.subr.bf16.mxu0 0
      %422 = vmatpush1.bf16.msra.mxu0 0
      %423 = vmatprep.subr.bf16.mxu0 0
      %424 = vmatpush1.bf16.msra.mxu0 0
      %425 = vmatprep.subr.bf16.mxu0 0
      %426 = vmatpush1.bf16.msra.mxu0 0
      %427 = vmatprep.mubr.bf16.mxu0 0
      %428 = vmatmul.mubr.bf16.gmra.mrb[0].mxu0 %v389
      %v429 = vpop.f32.mrb[0].mxu0
      %v430 = vadd.f32 %v383, %v429
      %v431 = vpop.f32.mrb[0].mxu0
      %v432 = vpop.f32.mrb[0].mxu0
      %v433 = vpop.f32.mrb[0].mxu0
      %434 = vdwg.mxu0
      %v435 = vrcp.pop %v336
      %v436 = vmul.f32 %v430, %v435
      %v437 = vpack.c.bf16 %v436, %v436
      %vm438 = vcmask 125952
      %439 = vst.msk [vmem:[%s206] sm:$0xf] %vm438, %v437
      %v440 = vld [vmem:[%s199] sm:$0xf]
      %v441 = vmul.bf16 %v440, 1048592000
      %v442 = vld [vmem:[%s1] sm:$0x3]
      %v443 = vld [vmem:[%s2] sm:$0x3]
      %v445 = vunpack.c.l.b16 %v441
      %v446 = vpack.c.b16 %v445, %v445
      %447 = vrot.lane.b32.xlu0 %v446, 112
      %v448 = vpop.permute.xlu0 %447
      %v451 = vunpack.c.l.s4 1983009808
      %v452 = vunpack.c.0.s8 %v451
      %v453 = vlaneseq
      %v454 = vshrl.u32 %v453, 7
      %v455 = vsub.s32 %v452, %v454
      %v456 = vrot.slane %v442, %v455
      %457 = vrot.lane.b32.xlu0 %v456, 112
      %v458 = vpop.permute.xlu0 %457
      %v460 = vsel %vm214, %v448, 0
      %v463 = vsel %vm214, %v458, 0
      %465 = vmatprep.subr.bf16.mxu0 0
      %466 = vmatpush1.bf16.xpose.msra.mxu0 %v463
      %467 = vmatprep.subr.bf16.mxu0 0
      %468 = vmatpush1.bf16.xpose.msra.mxu0 0
      %469 = vmatprep.subr.bf16.mxu0 0
      %470 = vmatpush1.bf16.xpose.msra.mxu0 0
      %471 = vmatprep.subr.bf16.mxu0 0
      %472 = vmatpush1.bf16.xpose.msra.mxu0 0
      %473 = vmatprep.subr.bf16.mxu0 0
      %474 = vmatpush1.bf16.xpose.msra.mxu0 0
      %475 = vmatprep.subr.bf16.mxu0 0
      %476 = vmatpush1.bf16.xpose.msra.mxu0 0
      %477 = vmatprep.subr.bf16.mxu0 0
      %478 = vmatpush1.bf16.xpose.msra.mxu0 0
      %479 = vmatprep.subr.bf16.mxu0 0
      %480 = vmatpush1.bf16.xpose.msra.mxu0 0
      %481 = vmatprep.subr.bf16.mxu0 0
      %482 = vmatpush1.bf16.xpose.msra.mxu0 0
      %483 = vmatprep.subr.bf16.mxu0 0
      %484 = vmatpush1.bf16.xpose.msra.mxu0 0
      %485 = vmatprep.subr.bf16.mxu0 0
      %486 = vmatpush1.bf16.xpose.msra.mxu0 0
      %487 = vmatprep.subr.bf16.mxu0 0
      %488 = vmatpush1.bf16.xpose.msra.mxu0 0
      %489 = vmatprep.subr.bf16.mxu0 0
      %490 = vmatpush1.bf16.xpose.msra.mxu0 0
      %491 = vmatprep.subr.bf16.mxu0 0
      %492 = vmatpush1.bf16.xpose.msra.mxu0 0
      %493 = vmatprep.subr.bf16.mxu0 0
      %494 = vmatpush1.bf16.xpose.msra.mxu0 0
      %495 = vmatprep.subr.bf16.mxu0 0
      %496 = vmatpush1.bf16.xpose.msra.mxu0 0
      %497 = vmatprep.mubr.bf16.mxu0 0
      %498 = vmatmul.mubr.bf16.gmra.mrb[0].mxu0 %v460
      %v499 = vpop.f32.mrb[0].mxu0
      %v500 = vadd.f32 0.0, %v499
      %v501 = vpop.f32.mrb[0].mxu0
      %v502 = vpop.f32.mrb[0].mxu0
      %v503 = vpop.f32.mrb[0].mxu0
      %504 = vdwg.mxu0
      %v506 = vunpack.c.l.b16 %v440
      %v507 = vpack.c.b16 %v506, %v506
      %508 = vrot.lane.b32.xlu0 %v507, 80
      %v509 = vpop.permute.xlu0 %508
      %v511 = vsel %vm214, %v509, 0
      %513 = vmatprep.subr.bf16.mxu0 0
      %514 = vmatpush1.bf16.xpose.msra.mxu0 %v511
      %515 = vmatprep.subr.bf16.mxu0 0
      %516 = vmatpush1.bf16.xpose.msra.mxu0 0
      %517 = vmatprep.subr.bf16.mxu0 0
      %518 = vmatpush1.bf16.xpose.msra.mxu0 0
      %519 = vmatprep.subr.bf16.mxu0 0
      %520 = vmatpush1.bf16.xpose.msra.mxu0 0
      %521 = vmatprep.subr.bf16.mxu0 0
      %522 = vmatpush1.bf16.xpose.msra.mxu0 0
      %523 = vmatprep.subr.bf16.mxu0 0
      %524 = vmatpush1.bf16.xpose.msra.mxu0 0
      %525 = vmatprep.subr.bf16.mxu0 0
      %526 = vmatpush1.bf16.xpose.msra.mxu0 0
      %527 = vmatprep.subr.bf16.mxu0 0
      %528 = vmatpush1.bf16.xpose.msra.mxu0 0
      %529 = vmatprep.subr.bf16.mxu0 0
      %530 = vmatpush1.bf16.xpose.msra.mxu0 0
      %531 = vmatprep.subr.bf16.mxu0 0
      %532 = vmatpush1.bf16.xpose.msra.mxu0 0
      %533 = vmatprep.subr.bf16.mxu0 0
      %534 = vmatpush1.bf16.xpose.msra.mxu0 0
      %535 = vmatprep.subr.bf16.mxu0 0
      %536 = vmatpush1.bf16.xpose.msra.mxu0 0
      %537 = vmatprep.subr.bf16.mxu0 0
      %538 = vmatpush1.bf16.xpose.msra.mxu0 0
      %539 = vmatprep.subr.bf16.mxu0 0
      %540 = vmatpush1.bf16.xpose.msra.mxu0 0
      %541 = vmatprep.subr.bf16.mxu0 0
      %542 = vmatpush1.bf16.xpose.msra.mxu0 0
      %543 = vmatprep.subr.bf16.mxu0 0
      %544 = vmatpush1.bf16.xpose.msra.mxu0 0
      %545 = vmatprep.mubr.bf16.mxu0 0
      %546 = vmatmul.mubr.bf16.gmra.mrb[0].mxu0 %v460
      %v547 = vpop.f32.mrb[0].mxu0
      %v548 = vadd.f32 %v265, %v547
      %v549 = vpop.f32.mrb[0].mxu0
      %v550 = vpop.f32.mrb[0].mxu0
      %v551 = vpop.f32.mrb[0].mxu0
      %552 = vdwg.mxu0
      %v553 = vsel %vm315, %v500, -inf
      %554 = vmax.xlane.f32.xlu0 %v553
      %v555 = vpop.xlane.xlu0 %554
      %v556 = vsel %vm319, %v548, -inf
      %557 = vmax.xlane.f32.xlu0 %v556
      %v558 = vpop.xlane.xlu0 %557
      %v559 = vmax.f32 %v555, %v558
      %v560 = vsub.f32 %v500, %v559
      %v561 = vmul.f32 %v560, 1.442695
      %v562 = vpow.pop %v561
      %v563 = vsub.f32 %v548, %v559
      %v564 = vmul.f32 %v563, 1.442695
      %v565 = vpow.pop %v564
      %v566 = vsel %vm315, %v562, 0.0
      %567 = vadd.xlane.f32.xlu0 %v566
      %v568 = vpop.xlane.xlu0 %567
      %v569 = vsel %vm319, %v565, 0.0
      %570 = vadd.xlane.f32.xlu0 %v569
      %v571 = vpop.xlane.xlu0 %570
      %v572 = vadd.f32 %v568, %v571
      %v573 = vpack.c.bf16 %v562, %v562
      %v574 = vpack.c.bf16 %v565, %v565
      %575 = vrot.lane.b32.xlu0 %v507, 48
      %v576 = vpop.permute.xlu0 %575
      %v578 = vsel %vm319, %v574, 0
      %v581 = vsel %vm344, %v576, 0
      %583 = vmatprep.subr.bf16.mxu0 0
      %584 = vmatpush1.bf16.msra.mxu0 %v581
      %585 = vmatprep.subr.bf16.mxu0 0
      %586 = vmatpush1.bf16.msra.mxu0 0
      %587 = vmatprep.subr.bf16.mxu0 0
      %588 = vmatpush1.bf16.msra.mxu0 0
      %589 = vmatprep.subr.bf16.mxu0 0
      %590 = vmatpush1.bf16.msra.mxu0 0
      %591 = vmatprep.subr.bf16.mxu0 0
      %592 = vmatpush1.bf16.msra.mxu0 0
      %593 = vmatprep.subr.bf16.mxu0 0
      %594 = vmatpush1.bf16.msra.mxu0 0
      %595 = vmatprep.subr.bf16.mxu0 0
      %596 = vmatpush1.bf16.msra.mxu0 0
      %597 = vmatprep.subr.bf16.mxu0 0
      %598 = vmatpush1.bf16.msra.mxu0 0
      %599 = vmatprep.subr.bf16.mxu0 0
      %600 = vmatpush1.bf16.msra.mxu0 0
      %601 = vmatprep.subr.bf16.mxu0 0
      %602 = vmatpush1.bf16.msra.mxu0 0
      %603 = vmatprep.subr.bf16.mxu0 0
      %604 = vmatpush1.bf16.msra.mxu0 0
      %605 = vmatprep.subr.bf16.mxu0 0
      %606 = vmatpush1.bf16.msra.mxu0 0
      %607 = vmatprep.subr.bf16.mxu0 0
      %608 = vmatpush1.bf16.msra.mxu0 0
      %609 = vmatprep.subr.bf16.mxu0 0
      %610 = vmatpush1.bf16.msra.mxu0 0
      %611 = vmatprep.subr.bf16.mxu0 0
      %612 = vmatpush1.bf16.msra.mxu0 0
      %613 = vmatprep.subr.bf16.mxu0 0
      %614 = vmatpush1.bf16.msra.mxu0 0
      %615 = vmatprep.mubr.bf16.mxu0 0
      %616 = vmatmul.mubr.bf16.gmra.mrb[0].mxu0 %v578
      %v617 = vpop.f32.mrb[0].mxu0
      %v618 = vadd.f32 0.0, %v617
      %v619 = vpop.f32.mrb[0].mxu0
      %v620 = vpop.f32.mrb[0].mxu0
      %v621 = vpop.f32.mrb[0].mxu0
      %622 = vdwg.mxu0
      %v625 = vunpack.c.l.s4 1983009808
      %v626 = vunpack.c.0.s8 %v625
      %v627 = vlaneseq
      %v628 = vshrl.u32 %v627, 7
      %v629 = vsub.s32 %v626, %v628
      %v630 = vrot.slane %v443, %v629
      %631 = vrot.lane.b32.xlu0 %v630, 112
      %v632 = vpop.permute.xlu0 %631
      %v634 = vsel %vm315, %v573, 0
      %v637 = vsel %vm391, %v632, 0
      %639 = vmatprep.subr.bf16.mxu0 0
      %640 = vmatpush1.bf16.msra.mxu0 %v637
      %641 = vmatprep.subr.bf16.mxu0 0
      %642 = vmatpush1.bf16.msra.mxu0 0
      %643 = vmatprep.subr.bf16.mxu0 0
      %644 = vmatpush1.bf16.msra.mxu0 0
      %645 = vmatprep.subr.bf16.mxu0 0
      %646 = vmatpush1.bf16.msra.mxu0 0
      %647 = vmatprep.subr.bf16.mxu0 0
      %648 = vmatpush1.bf16.msra.mxu0 0
      %649 = vmatprep.subr.bf16.mxu0 0
      %650 = vmatpush1.bf16.msra.mxu0 0
      %651 = vmatprep.subr.bf16.mxu0 0
      %652 = vmatpush1.bf16.msra.mxu0 0
      %653 = vmatprep.subr.bf16.mxu0 0
      %654 = vmatpush1.bf16.msra.mxu0 0
      %655 = vmatprep.subr.bf16.mxu0 0
      %656 = vmatpush1.bf16.msra.mxu0 0
      %657 = vmatprep.subr.bf16.mxu0 0
      %658 = vmatpush1.bf16.msra.mxu0 0
      %659 = vmatprep.subr.bf16.mxu0 0
      %660 = vmatpush1.bf16.msra.mxu0 0
      %661 = vmatprep.subr.bf16.mxu0 0
      %662 = vmatpush1.bf16.msra.mxu0 0
      %663 = vmatprep.subr.bf16.mxu0 0
      %664 = vmatpush1.bf16.msra.mxu0 0
      %665 = vmatprep.subr.bf16.mxu0 0
      %666 = vmatpush1.bf16.msra.mxu0 0
      %667 = vmatprep.subr.bf16.mxu0 0
      %668 = vmatpush1.bf16.msra.mxu0 0
      %669 = vmatprep.subr.bf16.mxu0 0
      %670 = vmatpush1.bf16.msra.mxu0 0
      %671 = vmatprep.mubr.bf16.mxu0 0
      %672 = vmatmul.mubr.bf16.gmra.mrb[0].mxu0 %v634
      %v673 = vpop.f32.mrb[0].mxu0
      %v674 = vadd.f32 %v618, %v673
      %v675 = vpop.f32.mrb[0].mxu0
      %v676 = vpop.f32.mrb[0].mxu0
      %v677 = vpop.f32.mrb[0].mxu0
      %678 = vdwg.mxu0
      %v679 = vrcp.pop %v572
      %v680 = vmul.f32 %v674, %v679
      %v681 = vpack.c.bf16 %v680, %v680
      %v683 = vunpack.c.l.b16 %v681
      %v684 = vpack.c.b16 %v683, %v683
      %685 = vrot.lane.b32.xlu0 %v684, 16
      %v686 = vpop.permute.xlu0 %685
      %vm688 = vcmask 257152
      %689 = vst.msk [vmem:[%s206] sm:$0xf] %vm688, %v686
      %p690 = scmp.lt.s32.totalorder %s15, 1
      %s691 = scalar_select %p690, %s15, 1
      %s692 = smul.addr %s691, 4
      %s693 = scalar_lea.vmem %s4, %s692
      // Predicated region
      $region37: #{fwd.14} parent=35 // pred_check
        %p694 = pneg %p127
      $region38: #{fwd.14} parent=35 // pred_check_branch
        %696 = sbr.rel (%p694) target = $region40
      $region39: #{fwd.14} parent=35 // pred_region
        _
      $region40: #{fwd.14} parent=35 // pred_fallthru
        _
    $region36: #{fwd.14} parent=5 // pred_fallthru
      _
    %p697 = scmp.le.s32.totalorder 2, %s10
    // Predicated region
    $region41: #{fwd.14} parent=5 // pred_check
      %p698 = pneg %p697
    $region42: #{fwd.14} parent=5 // pred_check_branch
      %700 = sbr.rel (%p698) target = $region44
    $region43: #{fwd.14} parent=5 // pred_region
      %s701 = ssub.s32 %s10, 2
      // Predicated region
      $region45: #{fwd.14} parent=43 // pred_check
        %p702 = pneg %p133
      $region46: #{fwd.14} parent=43 // pred_check_branch
        %704 = sbr.rel (%p702) target = $region48
      $region47: #{fwd.14} parent=43 // pred_region
        %p705 = scmp.lt.s32.totalorder %s16, 1
        %s706 = scalar_select %p705, %s16, 1
        %s707 = smul.addr %s706, 4
        %s708 = scalar_lea.vmem %s4, %s707
      $region48: #{fwd.14} parent=43 // pred_fallthru
        _
    $region44: #{fwd.14} parent=5 // pred_fallthru
      _
  $region6: #{fwd.14} parent=0 // loop_footer
    %s14 = sadd.s32 1, %s10
  $region7: #{fwd.14} parent=0 // loop_footer_branch
    %9 = sbr.rel target = $region3
  $region8: #{fwd.14} parent=0 // loop_exit
    _

// kernel: fwd.16
$region0: #{fwd.16}
  #allocation0 [shape = 'u32[]', space=smem, size = 0x4, offset = 0x4, fixed_abs, tag = 'smem constant byte address 0x4 - core index']
  #allocation1 [shape = 'u32[144,128]{1,0:T(1,128)}', space=vmem, size = 0x12000, scoped, tag = 'internal scratch']
  %s0 = inlined_call_operand.vmem [shape: bf16[16,32], index: 0, kind: input, shape index: {}]
  %s1 = inlined_call_operand.vmem [shape: bf16[32,64], index: 1, kind: input, shape index: {}]
  %s2 = inlined_call_operand.vmem [shape: f32[1,64], index: 2, kind: input, shape index: {}]
  %s3 = inlined_call_operand.vmem [shape: bf16[16,64], index: 3, kind: output, shape index: {}]
  %s4 = sld [smem:[#allocation0]]
  $region22: #{fwd.16} parent=0
    _
  %s6 = ssub.s32 1, %s4
  %s7 = scalar_select 0, %s6, %s4
  // Predicated region
  $region2: #{fwd.16} parent=0 // pred_check
    _
  $region3: #{fwd.16} parent=0 // pred_check_branch
    %9 = sbr.rel (0) target = $region5
  $region4: #{fwd.16} parent=0 // pred_region
    _
  $region5: #{fwd.16} parent=0 // pred_fallthru
    _
  // Predicated region
  $region6: #{fwd.16} parent=0 // pred_check
    _
  $region7: #{fwd.16} parent=0 // pred_check_branch
    %11 = sbr.rel (0) target = $region9
  $region8: #{fwd.16} parent=0 // pred_region
    _
  $region9: #{fwd.16} parent=0 // pred_fallthru
    _
  // Predicated region
  $region10: #{fwd.16} parent=0 // pred_check
    _
  $region11: #{fwd.16} parent=0 // pred_check_branch
    %13 = sbr.rel (0) target = $region13
  $region12: #{fwd.16} parent=0 // pred_region
    _
  $region13: #{fwd.16} parent=0 // pred_fallthru
    _
  %v15 = vld [vmem:[%s0] sm:$0xf]
  %v16 = vld [vmem:[%s0 + $0x4] sm:$0xf]
  %v17 = vld [vmem:[%s1] sm:$0xf]
  %v18 = vld [vmem:[%s1 + $0x4] sm:$0xf]
  %v19 = vld [vmem:[%s1 + $0x8] sm:$0xf]
  %v20 = vld [vmem:[%s1 + $0xc] sm:$0xf]
  %v21 = vld [vmem:[%s2] sm:$0x1]
  %v23 = vlaneseq
  %v24 = vshrl.u32 %v23, 7
  %v25 = vsub.s32 0, %v24
  %v26 = vrot.slane %v21, %v25
  %v30 = vunpack.c.l.b16 %v15
  %v31 = vunpack.c.l.b16 %v16
  %v32 = vpack.c.b16 %v31, %v30
  %v37 = vunpack.c.l.b16 %v17
  %v38 = vunpack.c.l.b16 %v18
  %v39 = vunpack.c.l.b16 %v19
  %v40 = vunpack.c.l.b16 %v20
  %v41 = vpack.c.b16 %v38, %v37
  %v42 = vpack.c.b16 %v40, %v39
  %vm45 = vcmask 261120
  %v47 = vsel %vm45, %v32, 0
  %49 = vmatprep.subr.bf16.mxu0 0
  %50 = vmatpush1.bf16.msra.mxu0 %v41
  %51 = vmatprep.subr.bf16.mxu0 0
  %52 = vmatpush1.bf16.msra.mxu0 %v42
  %53 = vmatprep.subr.bf16.mxu0 0
  %54 = vmatpush1.bf16.msra.mxu0 0
  %55 = vmatprep.subr.bf16.mxu0 0
  %56 = vmatpush1.bf16.msra.mxu0 0
  %57 = vmatprep.subr.bf16.mxu0 0
  %58 = vmatpush1.bf16.msra.mxu0 0
  %59 = vmatprep.subr.bf16.mxu0 0
  %60 = vmatpush1.bf16.msra.mxu0 0
  %61 = vmatprep.subr.bf16.mxu0 0
  %62 = vmatpush1.bf16.msra.mxu0 0
  %63 = vmatprep.subr.bf16.mxu0 0
  %64 = vmatpush1.bf16.msra.mxu0 0
  %65 = vmatprep.subr.bf16.mxu0 0
  %66 = vmatpush1.bf16.msra.mxu0 0
  %67 = vmatprep.subr.bf16.mxu0 0
  %68 = vmatpush1.bf16.msra.mxu0 0
  %69 = vmatprep.subr.bf16.mxu0 0
  %70 = vmatpush1.bf16.msra.mxu0 0
  %71 = vmatprep.subr.bf16.mxu0 0
  %72 = vmatpush1.bf16.msra.mxu0 0
  %73 = vmatprep.subr.bf16.mxu0 0
  %74 = vmatpush1.bf16.msra.mxu0 0
  %75 = vmatprep.subr.bf16.mxu0 0
  %76 = vmatpush1.bf16.msra.mxu0 0
  %77 = vmatprep.subr.bf16.mxu0 0
  %78 = vmatpush1.bf16.msra.mxu0 0
  %79 = vmatprep.subr.bf16.mxu0 0
  %80 = vmatpush1.bf16.msra.mxu0 0
  %81 = vmatprep.mubr.bf16.mxu0 0
  %82 = vmatmul.mubr.bf16.gmra.mrb[0].mxu0 %v47
  %v83 = vpop.f32.mrb[0].mxu0
  %v84 = vadd.f32 %v26, %v83
  %v85 = vpop.f32.mrb[0].mxu0
  %v86 = vpop.f32.mrb[0].mxu0
  %v87 = vadd.f32 %v26, %v86
  %v88 = vpop.f32.mrb[0].mxu0
  %89 = vdwg.mxu0
  %v90 = vmul.f32 %v84, 0.5
  %v91 = vmul.f32 %v87, 0.5
  %v92 = vmul.f32 %v84, 0.044715
  %v93 = vmul.f32 %v87, 0.044715
  %v94 = vmul.f32 %v92, %v84
  %v95 = vmul.f32 %v93, %v87
  %v96 = vmul.f32 %v94, %v84
  %v97 = vmul.f32 %v95, %v87
  %v98 = vadd.f32 %v84, %v96
  %v99 = vadd.f32 %v87, %v97
  %v100 = vmul.f32 %v98, 0.7978846
  %v101 = vmul.f32 %v99, 0.7978846
  %v102 = vtanh.pop %v100
  %v103 = vtanh.pop %v101
  %v104 = vadd.f32 %v102, 1.0
  %v105 = vadd.f32 %v103, 1.0
  %v106 = vmul.f32 %v90, %v104
  %v107 = vmul.f32 %v91, %v105
  %v108 = vpack.c.bf16 %v107, %v106
  %v110 = vunpack.c.l.b16 %v108
  %v111 = vunpack.c.h.b16 %v108
  %v112 = vpack.c.b16 %v110, %v110
  %v113 = vpack.c.b16 %v111, %v111
  %vm116 = vcmask 519168
  %117 = vst.msk [vmem:[%s3] sm:$0xf] %vm116, %v112
  %118 = vst.msk [vmem:[%s3 + $0x4] sm:$0xf] %vm116, %v113
  // Predicated region
  $region14: #{fwd.16} parent=0 // pred_check
    _
  $region15: #{fwd.16} parent=0 // pred_check_branch
    %120 = sbr.rel (0) target = $region17
  $region16: #{fwd.16} parent=0 // pred_region
    _
  $region17: #{fwd.16} parent=0 // pred_fallthru
    _
  // Predicated region
  $region18: #{fwd.16} parent=0 // pred_check
    _
  $region19: #{fwd.16} parent=0 // pred_check_branch
    %122 = sbr.rel (0) target = $region21
  $region20: #{fwd.16} parent=0 // pred_region
    _
  $region21: #{fwd.16} parent=0 // pred_fallthru
    _

// kernel: fwd.23
$region0: #{fwd.23}
  #allocation0 [shape = 'u32[]', space=smem, size = 0x4, offset = 0x4, fixed_abs, tag = 'smem constant byte address 0x4 - core index']
  #allocation1 [shape = 'u32[144,128]{1,0:T(1,128)}', space=vmem, size = 0x12000, scoped, tag = 'internal scratch']
  %s0 = inlined_call_operand.vmem [shape: bf16[2,8,32], index: 0, kind: input, shape index: {}]
  %s1 = inlined_call_operand.vmem [shape: f32[2,8,1], index: 1, kind: input, shape index: {}]
  %s2 = inlined_call_operand.vmem [shape: f32[2,1,32], index: 2, kind: output, shape index: {0}]
  %s3 = inlined_call_operand.vmem [shape: f32[2,1,32], index: 3, kind: output, shape index: {1}]
  %4 = xla_tuple %s2, %s3
  %s5 = sld [smem:[#allocation0]]
  $region49: #{fwd.23} parent=0
    _
  %s7 = ssub.s32 1, %s5
  %s8 = scalar_select 0, %s7, %s5
  loop: start=0, step=1, limit=4
  $region2: #{fwd.23} parent=0 // loop_pre_header
    _
  $region3: #{fwd.23} parent=0 // loop_header
    %s10 = sphi 0, %s14
    %p11 = scmp.ge.s32.totalorder %s10, 4
    %s20 = sphi 0, %s22
    %s23 = sphi 0, %s20
    %s24 = sphi 0, %s23
    %s40 = sphi 0, %s24
    %s46 = sphi 0, %s48
    %s49 = sphi 0, %s46
    %s50 = sphi 0, %s49
    %s66 = sphi 0, %s50
    %s72 = sphi 0, %s74
    %s75 = sphi 0, %s72
    %s76 = sphi 0, %s75
    %s92 = sphi 0, %s76
    %s98 = sphi 0, %s100
    %s101 = sphi 0, %s98
    %s102 = sphi 0, %s101
    %s118 = sphi 0, %s102
  $region4: #{fwd.23} parent=0 // loop_header_branch
    %13 = sbr.rel (%p11) target = $region8
  $region5: #{fwd.23} parent=0 // loop_body
    %s15 = ssub.s32 %s10, 1
    %s16 = ssub.s32 %s10, 2
    %s17 = sadd.s32 %s10, 1
    %s18 = ssub.s32 %s10, %s17
    %p19 = scmp.eq.s32.totalorder %s18, 0
    %s21 = sadd.s32 %s20, 1
    %s22 = scalar_select %p19, %s20, %s21
    %p25 = pneg %p19
    %p26 = scmp.eq.s32.totalorder %s10, 1
    %p27 = por %p25, %p26
    %p28 = scmp.ne.s32.totalorder %s20, %s23
    %p29 = scmp.eq.s32.totalorder %s10, 0
    %p30 = por %p28, %p29
    %p31 = scmp.ne.s32.totalorder %s20, %s23
    %p32 = scmp.eq.s32.totalorder %s15, 1
    %p33 = por %p31, %p32
    %p34 = scmp.ne.s32.totalorder %s23, %s24
    %p35 = scmp.eq.s32.totalorder %s15, 0
    %p36 = por %p34, %p35
    %p37 = scmp.ne.s32.totalorder %s23, %s24
    %p38 = scmp.eq.s32.totalorder %s16, 1
    %p39 = por %p37, %p38
    %p41 = scmp.ne.s32.totalorder %s24, %s40
    %p42 = scmp.eq.s32.totalorder %s16, 0
    %p43 = por %p41, %p42
    %s44 = ssub.s32 %s10, %s17
    %p45 = scmp.eq.s32.totalorder %s44, 0
    %s47 = sadd.s32 %s46, 1
    %s48 = scalar_select %p45, %s46, %s47
    %p51 = pneg %p45
    %p52 = scmp.eq.s32.totalorder %s10, 1
    %p53 = por %p51, %p52
    %p54 = scmp.ne.s32.totalorder %s46, %s49
    %p55 = scmp.eq.s32.totalorder %s10, 0
    %p56 = por %p54, %p55
    %p57 = scmp.ne.s32.totalorder %s46, %s49
    %p58 = scmp.eq.s32.totalorder %s15, 1
    %p59 = por %p57, %p58
    %p60 = scmp.ne.s32.totalorder %s49, %s50
    %p61 = scmp.eq.s32.totalorder %s15, 0
    %p62 = por %p60, %p61
    %p63 = scmp.ne.s32.totalorder %s49, %s50
    %p64 = scmp.eq.s32.totalorder %s16, 1
    %p65 = por %p63, %p64
    %p67 = scmp.ne.s32.totalorder %s50, %s66
    %p68 = scmp.eq.s32.totalorder %s16, 0
    %p69 = por %p67, %p68
    %s70 = ssub.s32 %s10, %s17
    %p71 = scmp.eq.s32.totalorder %s70, 0
    %s73 = sadd.s32 %s72, 1
    %s74 = scalar_select %p71, %s72, %s73
    %p77 = pneg %p71
    %p78 = scmp.eq.s32.totalorder %s10, 1
    %p79 = por %p77, %p78
    %p80 = scmp.ne.s32.totalorder %s72, %s75
    %p81 = scmp.eq.s32.totalorder %s10, 0
    %p82 = por %p80, %p81
    %p83 = scmp.ne.s32.totalorder %s72, %s75
    %p84 = scmp.eq.s32.totalorder %s15, 1
    %p85 = por %p83, %p84
    %p86 = scmp.ne.s32.totalorder %s75, %s76
    %p87 = scmp.eq.s32.totalorder %s15, 0
    %p88 = por %p86, %p87
    %p89 = scmp.ne.s32.totalorder %s75, %s76
    %p90 = scmp.eq.s32.totalorder %s16, 1
    %p91 = por %p89, %p90
    %p93 = scmp.ne.s32.totalorder %s76, %s92
    %p94 = scmp.eq.s32.totalorder %s16, 0
    %p95 = por %p93, %p94
    %s96 = ssub.s32 %s10, %s17
    %p97 = scmp.eq.s32.totalorder %s96, 0
    %s99 = sadd.s32 %s98, 1
    %s100 = scalar_select %p97, %s98, %s99
    %p103 = pneg %p97
    %p104 = scmp.eq.s32.totalorder %s10, 1
    %p105 = por %p103, %p104
    %p106 = scmp.ne.s32.totalorder %s98, %s101
    %p107 = scmp.eq.s32.totalorder %s10, 0
    %p108 = por %p106, %p107
    %p109 = scmp.ne.s32.totalorder %s98, %s101
    %p110 = scmp.eq.s32.totalorder %s15, 1
    %p111 = por %p109, %p110
    %p112 = scmp.ne.s32.totalorder %s101, %s102
    %p113 = scmp.eq.s32.totalorder %s15, 0
    %p114 = por %p112, %p113
    %p115 = scmp.ne.s32.totalorder %s101, %s102
    %p116 = scmp.eq.s32.totalorder %s16, 1
    %p117 = por %p115, %p116
    %p119 = scmp.ne.s32.totalorder %s102, %s118
    %p120 = scmp.eq.s32.totalorder %s16, 0
    %p121 = por %p119, %p120
    %p122 = scmp.le.s32.totalorder 1, %s10
    %p123 = scmp.lt.s32.totalorder %s10, 3
    %p124 = pnand %p122, %p123
    %p125 = pneg %p124
    // Predicated region
    $region9: #{fwd.23} parent=5 // pred_check
      _
    $region10: #{fwd.23} parent=5 // pred_check_branch
      %127 = sbr.rel (%p124) target = $region12
    $region11: #{fwd.23} parent=5 // pred_region
      %s128 = ssub.s32 %s10, 1
    $region12: #{fwd.23} parent=5 // pred_fallthru
      _
    %p129 = scmp.lt.s32.totalorder %s10, 2
    // Predicated region
    $region13: #{fwd.23} parent=5 // pred_check
      %p130 = pneg %p129
    $region14: #{fwd.23} parent=5 // pred_check_branch
      %132 = sbr.rel (%p130) target = $region16
    $region15: #{fwd.23} parent=5 // pred_region
      // Predicated region
      $region17: #{fwd.23} parent=15 // pred_check
        %p133 = pneg %p30
      $region18: #{fwd.23} parent=15 // pred_check_branch
        %135 = sbr.rel (%p133) target = $region20
      $region19: #{fwd.23} parent=15 // pred_region
        %p136 = scmp.lt.s32.totalorder %s10, 1
        %s137 = scalar_select %p136, %s10, 1
        %s138 = smul.addr %s137, 4
        %s139 = scalar_lea.vmem %s0, %s138
      $region20: #{fwd.23} parent=15 // pred_fallthru
        _
      // Predicated region
      $region21: #{fwd.23} parent=15 // pred_check
        %p140 = pneg %p56
      $region22: #{fwd.23} parent=15 // pred_check_branch
        %142 = sbr.rel (%p140) target = $region24
      $region23: #{fwd.23} parent=15 // pred_region
        %p143 = scmp.lt.s32.totalorder %s10, 1
        %s144 = scalar_select %p143, %s10, 1
        %s145 = smul.addr %s144, 8
        %s146 = scalar_lea.vmem %s1, %s145
      $region24: #{fwd.23} parent=15 // pred_fallthru
        _
    $region16: #{fwd.23} parent=5 // pred_fallthru
      _
    %p147 = scmp.le.s32.totalorder 1, %s10
    %p148 = scmp.lt.s32.totalorder %s10, 3
    %p149 = pnand %p147, %p148
    %p150 = pneg %p149
    // Predicated region
    $region25: #{fwd.23} parent=5 // pred_check
      _
    $region26: #{fwd.23} parent=5 // pred_check_branch
      %152 = sbr.rel (%p149) target = $region28
    $region27: #{fwd.23} parent=5 // pred_region
      %s153 = ssub.s32 %s10, 1
      %p154 = scmp.lt.s32.totalorder %s15, 1
      %s155 = scalar_select %p154, %s15, 1
      %s156 = smul.addr %s155, 4
      %s157 = scalar_lea.vmem %s0, %s156
      %p158 = pneg %p36
      %p159 = pneg %p33
      %p160 = scmp.lt.s32.totalorder %s15, 1
      %s161 = scalar_select %p160, %s15, 1
      %s162 = smul.addr %s161, 8
      %s163 = scalar_lea.vmem %s1, %s162
      %p164 = pneg %p62
      %p165 = pneg %p59
      %p166 = pneg %p88
      %p167 = pneg %p85
      %p168 = scmp.lt.s32.totalorder %s15, 1
      %s169 = scalar_select %p168, %s15, 1
      %s170 = scalar_lea.vmem %s2, %s169
      %p171 = pneg %p114
      %p172 = pneg %p111
      %p173 = scmp.lt.s32.totalorder %s15, 1
      %s174 = scalar_select %p173, %s15, 1
      %s175 = scalar_lea.vmem %s3, %s174
      %p176 = scmp.lt.s32.totalorder %s15, 1
      %s177 = scalar_select %p176, %s15, 1
      %s178 = smul.addr %s177, 4
      %s179 = scalar_lea.vmem %s0, %s178
      %p180 = scmp.lt.s32.totalorder %s15, 1
      %s181 = scalar_select %p180, %s15, 1
      %s182 = smul.addr %s181, 8
      %s183 = scalar_lea.vmem %s1, %s182
      %p184 = scmp.lt.s32.totalorder %s15, 1
      %s185 = scalar_select %p184, %s15, 1
      %s186 = scalar_lea.vmem %s2, %s185
      %p187 = scmp.lt.s32.totalorder %s15, 1
      %s188 = scalar_select %p187, %s15, 1
      %s189 = scalar_lea.vmem %s3, %s188
      %v190 = vld [vmem:[%s179] sm:$0xf]
      %v191 = vunpack.c.l.bf16 %v190
      %v192 = vld [vmem:[%s183] sm:$0xff]
      %194 = vset.pattern.permute.xlu0 0
      %195 = vperm.xlu0 %194, %v192
      %v196 = vpop.permute.xlu0 %195
      %v198 = vmul.f32 %v196, %v191
      %vm199 = vcmask 7168
      %v200 = vsel %vm199, %v192, 0.0
      %v201 = vrot.slane %v200, 4
      %v202 = vadd.f32 %v200, %v201
      %v203 = vrot.slane %v202, 2
      %v204 = vadd.f32 %v202, %v203
      %v205 = vrot.slane %v204, 1
      %v206 = vadd.f32 %v204, %v205
      %v207 = vadd.f32 %v206, 1e-12
      %vm208 = vcmask 261120
      %v209 = vsel %vm208, %v198, 0.0
      %v210 = vrot.slane %v209, 4
      %v211 = vadd.f32 %v209, %v210
      %v212 = vrot.slane %v211, 2
      %v213 = vadd.f32 %v211, %v212
      %v214 = vrot.slane %v213, 1
      %v215 = vadd.f32 %v213, %v214
      %217 = vset.pattern.permute.xlu0 0
      %218 = vperm.xlu0 %217, %v207
      %v219 = vpop.permute.xlu0 %218
      %v221 = vrcp.pop %v219
      %v222 = vmul.f32 %v215, %v221
      %vm223 = vcmask 253952
      %224 = vst.msk [vmem:[%s186] sm:$0x1] %vm223, %v222
      %vm225 = vcmp.eq.f32.partialorder %v198, 0.0
      %vm226 = vcmp.eq.f32.partialorder %v198, 1.0
      %v227 = vsel %vm226, 0.0, %v198
      %v228 = vsel %vm225, -inf, %v227
      %v229 = vadd.f32 %v228, %v191
      %v230 = vsel %vm208, %v229, -inf
      %v231 = vrot.slane %v230, 4
      %v232 = vmax.f32 %v230, %v231
      %v233 = vrot.slane %v232, 2
      %v234 = vmax.f32 %v232, %v233
      %v235 = vrot.slane %v234, 1
      %v236 = vmax.f32 %v234, %v235
      %237 = vst.msk [vmem:[%s189] sm:$0x1] %vm223, %v236
      %p238 = scmp.lt.s32.totalorder %s15, 1
      %s239 = scalar_select %p238, %s15, 1
      %s240 = scalar_lea.vmem %s2, %s239
      %p241 = scmp.lt.s32.totalorder %s15, 1
      %s242 = scalar_select %p241, %s15, 1
      %s243 = scalar_lea.vmem %s3, %s242
      // Predicated region
      $region29: #{fwd.23} parent=27 // pred_check
        %p244 = pneg %p85
      $region30: #{fwd.23} parent=27 // pred_check_branch
        %246 = sbr.rel (%p244) target = $region32
      $region31: #{fwd.23} parent=27 // pred_region
        _
      $region32: #{fwd.23} parent=27 // pred_fallthru
        _
      // Predicated region
      $region33: #{fwd.23} parent=27 // pred_check
        %p247 = pneg %p111
      $region34: #{fwd.23} parent=27 // pred_check_branch
        %249 = sbr.rel (%p247) target = $region36
      $region35: #{fwd.23} parent=27 // pred_region
        _
      $region36: #{fwd.23} parent=27 // pred_fallthru
        _
    $region28: #{fwd.23} parent=5 // pred_fallthru
      _
    %p250 = scmp.le.s32.totalorder 2, %s10
    // Predicated region
    $region37: #{fwd.23} parent=5 // pred_check
      %p251 = pneg %p250
    $region38: #{fwd.23} parent=5 // pred_check_branch
      %253 = sbr.rel (%p251) target = $region40
    $region39: #{fwd.23} parent=5 // pred_region
      %s254 = ssub.s32 %s10, 2
      // Predicated region
      $region41: #{fwd.23} parent=39 // pred_check
        %p255 = pneg %p91
      $region42: #{fwd.23} parent=39 // pred_check_branch
        %257 = sbr.rel (%p255) target = $region44
      $region43: #{fwd.23} parent=39 // pred_region
        %p258 = scmp.lt.s32.totalorder %s16, 1
        %s259 = scalar_select %p258, %s16, 1
        %s260 = scalar_lea.vmem %s2, %s259
      $region44: #{fwd.23} parent=39 // pred_fallthru
        _
      // Predicated region
      $region45: #{fwd.23} parent=39 // pred_check
        %p261 = pneg %p117
      $region46: #{fwd.23} parent=39 // pred_check_branch
        %263 = sbr.rel (%p261) target = $region48
      $region47: #{fwd.23} parent=39 // pred_region
        %p264 = scmp.lt.s32.totalorder %s16, 1
        %s265 = scalar_select %p264, %s16, 1
        %s266 = scalar_lea.vmem %s3, %s265
      $region48: #{fwd.23} parent=39 // pred_fallthru
        _
    $region40: #{fwd.23} parent=5 // pred_fallthru
      _
  $region6: #{fwd.23} parent=0 // loop_footer
    %s14 = sadd.s32 1, %s10
  $region7: #{fwd.23} parent=0 // loop_footer_branch
    %9 = sbr.rel target = $region3
  $region8: #{fwd.23} parent=0 // loop_exit
    _

// kernel: fwd.17
$region0: #{fwd.17}
  #allocation0 [shape = 'u32[]', space=smem, size = 0x4, offset = 0x4, fixed_abs, tag = 'smem constant byte address 0x4 - core index']
  #allocation1 [shape = 'u32[144,128]{1,0:T(1,128)}', space=vmem, size = 0x12000, scoped, tag = 'internal scratch']
  %s0 = inlined_call_operand.vmem [shape: bf16[16,64], index: 0, kind: input, shape index: {}]
  %s1 = inlined_call_operand.vmem [shape: bf16[64,32], index: 1, kind: input, shape index: {}]
  %s2 = inlined_call_operand.vmem [shape: f32[1,32], index: 2, kind: input, shape index: {}]
  %s3 = inlined_call_operand.vmem [shape: bf16[16,32], index: 3, kind: input, shape index: {}]
  %s4 = inlined_call_operand.vmem [shape: f32[1,32], index: 4, kind: input, shape index: {}]
  %s5 = inlined_call_operand.vmem [shape: f32[1,32], index: 5, kind: input, shape index: {}]
  %s6 = inlined_call_operand.vmem [shape: bf16[16,32], index: 6, kind: output, shape index: {}]
  %s7 = sld [smem:[#allocation0]]
  $region34: #{fwd.17} parent=0
    _
  %s9 = ssub.s32 1, %s7
  %s10 = scalar_select 0, %s9, %s7
  // Predicated region
  $region2: #{fwd.17} parent=0 // pred_check
    _
  $region3: #{fwd.17} parent=0 // pred_check_branch
    %12 = sbr.rel (0) target = $region5
  $region4: #{fwd.17} parent=0 // pred_region
    _
  $region5: #{fwd.17} parent=0 // pred_fallthru
    _
  // Predicated region
  $region6: #{fwd.17} parent=0 // pred_check
    _
  $region7: #{fwd.17} parent=0 // pred_check_branch
    %14 = sbr.rel (0) target = $region9
  $region8: #{fwd.17} parent=0 // pred_region
    _
  $region9: #{fwd.17} parent=0 // pred_fallthru
    _
  // Predicated region
  $region10: #{fwd.17} parent=0 // pred_check
    _
  $region11: #{fwd.17} parent=0 // pred_check_branch
    %16 = sbr.rel (0) target = $region13
  $region12: #{fwd.17} parent=0 // pred_region
    _
  $region13: #{fwd.17} parent=0 // pred_fallthru
    _
  // Predicated region
  $region14: #{fwd.17} parent=0 // pred_check
    _
  $region15: #{fwd.17} parent=0 // pred_check_branch
    %18 = sbr.rel (0) target = $region17
  $region16: #{fwd.17} parent=0 // pred_region
    _
  $region17: #{fwd.17} parent=0 // pred_fallthru
    _
  // Predicated region
  $region18: #{fwd.17} parent=0 // pred_check
    _
  $region19: #{fwd.17} parent=0 // pred_check_branch
    %20 = sbr.rel (0) target = $region21
  $region20: #{fwd.17} parent=0 // pred_region
    _
  $region21: #{fwd.17} parent=0 // pred_fallthru
    _
  // Predicated region
  $region22: #{fwd.17} parent=0 // pred_check
    _
  $region23: #{fwd.17} parent=0 // pred_check_branch
    %22 = sbr.rel (0) target = $region25
  $region24: #{fwd.17} parent=0 // pred_region
    _
  $region25: #{fwd.17} parent=0 // pred_fallthru
    _
  %v24 = vld [vmem:[%s0] sm:$0xf]
  %v25 = vld [vmem:[%s0 + $0x4] sm:$0xf]
  %v26 = vld [vmem:[%s1] sm:$0xf]
  %v27 = vld [vmem:[%s1 + $0x4] sm:$0xf]
  %v28 = vld [vmem:[%s1 + $0x8] sm:$0xf]
  %v29 = vld [vmem:[%s1 + $0xc] sm:$0xf]
  %v30 = vld [vmem:[%s1 + $0x10] sm:$0xf]
  %v31 = vld [vmem:[%s1 + $0x14] sm:$0xf]
  %v32 = vld [vmem:[%s1 + $0x18] sm:$0xf]
  %v33 = vld [vmem:[%s1 + $0x1c] sm:$0xf]
  %v34 = vld [vmem:[%s2] sm:$0x1]
  %v36 = vlaneseq
  %v37 = vshrl.u32 %v36, 7
  %v38 = vsub.s32 0, %v37
  %v39 = vrot.slane %v34, %v38
  %v43 = vunpack.c.l.b16 %v24
  %v44 = vunpack.c.l.b16 %v25
  %v45 = vpack.c.b16 %v44, %v43
  %v54 = vunpack.c.l.b16 %v26
  %v55 = vunpack.c.l.b16 %v27
  %v56 = vunpack.c.l.b16 %v28
  %v57 = vunpack.c.l.b16 %v29
  %v58 = vunpack.c.l.b16 %v30
  %v59 = vunpack.c.l.b16 %v31
  %v60 = vunpack.c.l.b16 %v32
  %v61 = vunpack.c.l.b16 %v33
  %v62 = vpack.c.b16 %v55, %v54
  %v63 = vpack.c.b16 %v57, %v56
  %v64 = vpack.c.b16 %v59, %v58
  %v65 = vpack.c.b16 %v61, %v60
  %vm70 = vcmask 523264
  %v72 = vsel %vm70, %v45, 0
  %74 = vmatprep.subr.bf16.mxu0 0
  %75 = vmatpush1.bf16.msra.mxu0 %v62
  %76 = vmatprep.subr.bf16.mxu0 0
  %77 = vmatpush1.bf16.msra.mxu0 %v63
  %78 = vmatprep.subr.bf16.mxu0 0
  %79 = vmatpush1.bf16.msra.mxu0 %v64
  %80 = vmatprep.subr.bf16.mxu0 0
  %81 = vmatpush1.bf16.msra.mxu0 %v65
  %82 = vmatprep.subr.bf16.mxu0 0
  %83 = vmatpush1.bf16.msra.mxu0 0
  %84 = vmatprep.subr.bf16.mxu0 0
  %85 = vmatpush1.bf16.msra.mxu0 0
  %86 = vmatprep.subr.bf16.mxu0 0
  %87 = vmatpush1.bf16.msra.mxu0 0
  %88 = vmatprep.subr.bf16.mxu0 0
  %89 = vmatpush1.bf16.msra.mxu0 0
  %90 = vmatprep.subr.bf16.mxu0 0
  %91 = vmatpush1.bf16.msra.mxu0 0
  %92 = vmatprep.subr.bf16.mxu0 0
  %93 = vmatpush1.bf16.msra.mxu0 0
  %94 = vmatprep.subr.bf16.mxu0 0
  %95 = vmatpush1.bf16.msra.mxu0 0
  %96 = vmatprep.subr.bf16.mxu0 0
  %97 = vmatpush1.bf16.msra.mxu0 0
  %98 = vmatprep.subr.bf16.mxu0 0
  %99 = vmatpush1.bf16.msra.mxu0 0
  %100 = vmatprep.subr.bf16.mxu0 0
  %101 = vmatpush1.bf16.msra.mxu0 0
  %102 = vmatprep.subr.bf16.mxu0 0
  %103 = vmatpush1.bf16.msra.mxu0 0
  %104 = vmatprep.subr.bf16.mxu0 0
  %105 = vmatpush1.bf16.msra.mxu0 0
  %106 = vmatprep.mubr.bf16.mxu0 0
  %107 = vmatmul.mubr.bf16.gmra.mrb[0].mxu0 %v72
  %v108 = vpop.f32.mrb[0].mxu0
  %v109 = vadd.f32 %v39, %v108
  %v110 = vpop.f32.mrb[0].mxu0
  %v111 = vpop.f32.mrb[0].mxu0
  %v112 = vadd.f32 %v39, %v111
  %v113 = vpop.f32.mrb[0].mxu0
  %114 = vdwg.mxu0
  %v115 = vld [vmem:[%s3] sm:$0xf]
  %v116 = vld [vmem:[%s3 + $0x4] sm:$0xf]
  %v117 = vunpack.c.l.bf16 %v115
  %v118 = vunpack.c.l.bf16 %v116
  %v119 = vadd.f32 %v109, %v117
  %v120 = vadd.f32 %v112, %v118
  %vm121 = vcmask 261120
  %v122 = vsel %vm121, %v119, 0.0
  %123 = vadd.xlane.f32.xlu0 %v122
  %v124 = vpop.xlane.xlu0 %123
  %v125 = vsel %vm121, %v120, 0.0
  %126 = vadd.xlane.f32.xlu0 %v125
  %v127 = vpop.xlane.xlu0 %126
  %v128 = vrcp.pop 32.0
  %v129 = vmul.f32 %v124, %v128
  %v130 = vmul.f32 %v127, %v128
  %v131 = vsub.f32 %v119, %v129
  %v132 = vsub.f32 %v120, %v130
  %v133 = vmul.f32 %v131, %v131
  %v134 = vmul.f32 %v132, %v132
  %v135 = vsel %vm121, %v133, 0.0
  %136 = vadd.xlane.f32.xlu0 %v135
  %v137 = vpop.xlane.xlu0 %136
  %v138 = vsel %vm121, %v134, 0.0
  %139 = vadd.xlane.f32.xlu0 %v138
  %v140 = vpop.xlane.xlu0 %139
  %v141 = vmul.f32 %v137, %v128
  %v142 = vmul.f32 %v140, %v128
  %v143 = vadd.f32 %v141, 1e-12
  %v144 = vadd.f32 %v142, 1e-12
  %v145 = vrsqrt.pop %v143
  %v146 = vrsqrt.pop %v144
  %v147 = vmul.f32 %v131, %v145
  %v148 = vmul.f32 %v132, %v146
  %v149 = vld [vmem:[%s4] sm:$0x1]
  %v151 = vlaneseq
  %v152 = vshrl.u32 %v151, 7
  %v153 = vsub.s32 0, %v152
  %v154 = vrot.slane %v149, %v153
  %v156 = vmul.f32 %v147, %v154
  %v157 = vmul.f32 %v148, %v154
  %v158 = vld [vmem:[%s5] sm:$0x1]
  %v160 = vlaneseq
  %v161 = vshrl.u32 %v160, 7
  %v162 = vsub.s32 0, %v161
  %v163 = vrot.slane %v158, %v162
  %v165 = vadd.f32 %v156, %v163
  %v166 = vadd.f32 %v157, %v163
  %v167 = vpack.c.bf16 %v166, %v165
  %v169 = vunpack.c.l.b16 %v167
  %v170 = vunpack.c.h.b16 %v167
  %v171 = vpack.c.b16 %v169, %v169
  %v172 = vpack.c.b16 %v170, %v170
  %vm175 = vcmask 257024
  %176 = vst.msk [vmem:[%s6] sm:$0xf] %vm175, %v171
  %177 = vst.msk [vmem:[%s6 + $0x4] sm:$0xf] %vm175, %v172
  // Predicated region
  $region26: #{fwd.17} parent=0 // pred_check
    _
  $region27: #{fwd.17} parent=0 // pred_check_branch
    %179 = sbr.rel (0) target = $region29
  $region28: #{fwd.17} parent=0 // pred_region
    _
  $region29: #{fwd.17} parent=0 // pred_fallthru
    _
  // Predicated region
  $region30: #{fwd.17} parent=0 // pred_check
    _
  $region31: #{fwd.17} parent=0 // pred_check_branch
    %181 = sbr.rel (0) target = $region33
  $region32: #{fwd.17} parent=0 // pred_region
    _
  $region33: #{fwd.17} parent=0 // pred_fallthru
    _

</llo_original>
